<compile_context>
chip_gen: v7x
topology: tpu7x:2x2x1
jax: 0.10.0
libtpu: 0.0.40
codegen_flags: <defaults>
</compile_context>

<pallas_src>
import functools

import jax
import jax.numpy as jnp
from jax.experimental import pallas as pl
from jax.experimental.pallas import tpu as pltpu

BN_EPS = 1e-5
NEG_INF = -1e30  # bias for padded feature columns -> exp underflows to 0


def _decoder_kernel(x_ref, w1_ref, b1_ref, w2_ref, b2_ref, lsf_ref, out_ref,
                    *, Hp, M):
    """One grid step = one batch tile; all three modality branches inside."""
    # Single wide first layer: [tB, Din] x [Din, M*Hp]  (BN folded into w1/b1
    # in the wrapper; Dropout = identity in eval mode).
    h = jnp.dot(x_ref[...], w1_ref[...], preferred_element_type=jnp.float32)
    h = jnp.maximum(h + b1_ref[...], 0.0)                       # [tB, M*Hp]

    for m in range(M):                       # static unroll: no grid overhead
        hm = h[:, m * Hp:(m + 1) * Hp]       # lane-aligned view (Hp = 128k)
        logits = jnp.dot(hm, w2_ref[m], preferred_element_type=jnp.float32)
        logits = logits + b2_ref[m]                             # [tB, Fp]
        mx = jnp.max(logits, axis=-1, keepdims=True)
        e = jnp.exp(logits - mx)
        denom = jnp.sum(e, axis=-1, keepdims=True)              # [tB, 1]
        # Fold library-size factor into the per-row scale: one [tB,Fp] multiply,
        # no extra materialized [tB,Fp] temporaries (v5e has 1 vst slot).
        scale = lsf_ref[:, m:m + 1] * pl.reciprocal(denom, approx=False)
        out_ref[m] = e * scale


def _vmem_limit_bytes():
    """Scoped VMEM limit: 3/4 of physical capacity, capped at 64 MiB."""
    cap = 128 * 1024 * 1024
    try:
        cap = int(pltpu.get_tpu_info().vmem_capacity_bytes)
    except Exception:
        pass
    return min(64 * 1024 * 1024, (cap * 3) // 4)


def _is_v7x():
    try:
        return "v7" in jax.devices()[0].device_kind.lower()
    except Exception:
        return False


def _pick_batch_tile(B, is_v7x):
    """Batch tile: big tiles on 128-MiB parts; >=2 grid steps on v7x (2 TCs)."""
    Bp8 = ((B + 7) // 8) * 8
    tB = min(Bp8, 256 if is_v7x else 512)
    if is_v7x and Bp8 > 8:
        half = ((max(8, Bp8 // 2) + 7) // 8) * 8
        tB = min(tB, half)
    return tB


def _make_pallas_fn(tB, Bp, Din, M, Hp, Fp, single_buffer_weights):
    """Build the pallas_call for one configuration."""
    MHp = M * Hp

    def weight_spec(shape):
        idx = lambda i, _n=len(shape): (0,) * _n
        if single_buffer_weights and hasattr(pl, "Buffered"):
            try:
                # Grid-invariant: never re-DMA'd, one buffer is enough.
                return pl.BlockSpec(shape, idx, pipeline_mode=pl.Buffered(1))
            except TypeError:
                pass
        return pl.BlockSpec(shape, idx)

    grid_spec = pltpu.PrefetchScalarGridSpec(
        num_scalar_prefetch=0,
        grid=(Bp // tB,),
        in_specs=[
            pl.BlockSpec((tB, Din), lambda i: (i, 0)),       # x = [z, batch_id]
            weight_spec((Din, MHp)),                         # fused W1 (BN folded)
            weight_spec((1, MHp)),                           # fused bias1
            weight_spec((M, Hp, Fp)),                        # W2 (padded)
            weight_spec((M, 1, Fp)),                         # b2 (padded)
            pl.BlockSpec((tB, M), lambda i: (i, 0)),         # library size factor
        ],
        out_specs=pl.BlockSpec((M, tB, Fp), lambda i: (0, i, 0)),
    )

    return pl.pallas_call(
        functools.partial(_decoder_kernel, Hp=Hp, M=M),
        out_shape=jax.ShapeDtypeStruct((M, Bp, Fp), jnp.float32),
        grid_spec=grid_spec,
        compiler_params=pltpu.CompilerParams(
            dimension_semantics=("parallel",),
            vmem_limit_bytes=_vmem_limit_bytes()),
    )


def decoder_exp3_poe_forward(z, batch_id, library_size_factor, params):
    """params: dict with stacked per-modality weights (see _init_params)."""
    f32 = jnp.float32
    B, dim_latent = z.shape
    num_sample = batch_id.shape[1]
    M, Din, H = params["w1"].shape
    F = params["w2"].shape[-1]
    assert Din == dim_latent + num_sample and M == 3

    # ---- fold eval-mode BatchNorm into the first Linear (trace time) -------
    inv = params["gamma"].astype(f32) * jax.lax.rsqrt(
        params["rvar"].astype(f32) + BN_EPS)                    # [M,1,H]
    w1f = params["w1"].astype(f32) * inv                        # [M,Din,H]
    b1f = (params["b1"].astype(f32) - params["rmean"]) * inv + params["beta"]

    # ---- pad each modality's hidden slot to 128 lanes (aligned h slices,
    #      K=128 for the second dot; zero rows/cols contribute exactly 0) ----
    Hp = ((H + 127) // 128) * 128
    w1p = jnp.zeros((M, Din, Hp), f32).at[:, :, :H].set(w1f)
    b1p = jnp.zeros((M, 1, Hp), f32).at[:, :, :H].set(b1f)
    # widen: first layer becomes a single [B, Din] x [Din, M*Hp] MXU call
    w1_wide = jnp.transpose(w1p, (1, 0, 2)).reshape(Din, M * Hp)
    b1_wide = jnp.transpose(b1p, (1, 0, 2)).reshape(1, M * Hp)

    # ---- lane-dense output: pad feature axis to a multiple of 128 ----------
    Fp = ((F + 127) // 128) * 128
    w2p = jnp.zeros((M, Hp, Fp), f32).at[:, :H, :F].set(params["w2"].astype(f32))
    b2p = jnp.full((M, 1, Fp), NEG_INF, f32).at[:, :, :F].set(
        params["b2"].astype(f32))

    # ---- batch tiling (generation-aware) ------------------------------------
    is_v7x = _is_v7x()
    tB = _pick_batch_tile(B, is_v7x)
    Bp = ((B + tB - 1) // tB) * tB

    def pad_rows(x):
        return x if x.shape[0] == Bp else jnp.pad(
            x, ((0, Bp - x.shape[0]),) + ((0, 0),) * (x.ndim - 1))

    # re-concat z/batch_id in the wrapper (tiny vs the [3,B,F] output) so the
    # kernel's first layer is ONE dot.
    x = jnp.concatenate([z.astype(f32), batch_id.astype(f32)], axis=-1)
    xp = pad_rows(x)
    lsfp = pad_rows(library_size_factor.reshape(B, M).astype(f32))

    args = (xp, w1_wide, b1_wide, w2p, b2p, lsfp)
    try:
        out = _make_pallas_fn(tB, Bp, Din, M, Hp, Fp, True)(*args)
    except Exception:
        # Fallback if this JAX version rejects pipeline_mode=pl.Buffered(1).
        out = _make_pallas_fn(tB, Bp, Din, M, Hp, Fp, False)(*args)

    # Same return structure as the PyTorch module (strip padding).
    return [{"mean": out[m, :B, :F]} for m in range(M)]


def _init_params(key, din, hidden, feat, modalities=3):
    ks = jax.random.split(key, 8)
    s1 = 1.0 / jnp.sqrt(din)
    s2 = 1.0 / jnp.sqrt(hidden)
    return {
        "w1":    jax.random.uniform(ks[0], (modalities, din, hidden),
                                    jnp.float32, -s1, s1),
        "b1":    jax.random.uniform(ks[1], (modalities, 1, hidden),
                                    jnp.float32, -s1, s1),
        "gamma": 1.0 + 0.1 * jax.random.normal(ks[2], (modalities, 1, hidden),
                                               jnp.float32),
        "beta":  0.1 * jax.random.normal(ks[3], (modalities, 1, hidden),
                                         jnp.float32),
        "rmean": 0.05 * jax.random.normal(ks[4], (modalities, 1, hidden),
                                          jnp.float32),
        "rvar":  1.0 + 0.1 * jnp.abs(
            jax.random.normal(ks[5], (modalities, 1, hidden), jnp.float32)),
        "w2":    jax.random.uniform(ks[6], (modalities, hidden, feat),
                                    jnp.float32, -s2, s2),
        "b2":    jax.random.uniform(ks[7], (modalities, 1, feat),
                                    jnp.float32, -s2, s2),
    }


if __name__ == "__main__":
    B, DIM_LATENT, NUM_SAMPLE, HIDDEN, FEAT = 8, 16, 4, 32, 64
    DIN = DIM_LATENT + NUM_SAMPLE

    key = jax.random.PRNGKey(0)
    k_z, k_b, k_l, k_p = jax.random.split(key, 4)

    z = jax.random.normal(k_z, (B, DIM_LATENT), jnp.float32)
    batch_id = jax.nn.one_hot(
        jax.random.randint(k_b, (B,), 0, NUM_SAMPLE), NUM_SAMPLE,
        dtype=jnp.float32)
    library_size_factor = jnp.exp(
        jax.random.normal(k_l, (B, 3, 1), jnp.float32))

    params = _init_params(k_p, DIN, HIDDEN, FEAT)

    px_z = decoder_exp3_poe_forward(z, batch_id, library_size_factor, params)
    for d in px_z:
        jax.block_until_ready(d["mean"])

    # sanity check against pure-JAX reference (un-fused BN, exact softmax)
    zc = jnp.concatenate([z, batch_id], axis=-1)
    for m in range(3):
        h = zc @ params["w1"][m] + params["b1"][m]
        h = (h - params["rmean"][m]) * jax.lax.rsqrt(
            params["rvar"][m] + BN_EPS) * params["gamma"][m] + params["beta"][m]
        h = jnp.maximum(h, 0.0)
        ref = jax.nn.softmax(h @ params["w2"][m] + params["b2"][m], axis=-1)
        ref = ref * library_size_factor[:, m, :]
        assert jnp.allclose(px_z[m]["mean"], ref, atol=1e-5, rtol=5e-5)

    print("KERNEL_OK")
</pallas_src>

<mosaic_0001>
module attributes {stable_mosaic.version = 11 : i64} {
  func.func @_decoder_kernel(%arg0: i32, %arg1: memref<8x20xf32, #tpu.memory_space<vmem>>, %arg2: memref<20x384xf32, #tpu.memory_space<vmem>>, %arg3: memref<1x384xf32, #tpu.memory_space<vmem>>, %arg4: memref<3x128x128xf32, #tpu.memory_space<vmem>>, %arg5: memref<3x1x128xf32, #tpu.memory_space<vmem>>, %arg6: memref<8x3xf32, #tpu.memory_space<vmem>>, %arg7: memref<3x8x128xf32, #tpu.memory_space<vmem>>) attributes {dimension_semantics = [#tpu.dimension_semantics<parallel>], iteration_bounds = array<i64: 1>, scalar_prefetch = 0 : i64, scratch_operands = 0 : i64, tpu.core_type = #tpu.core_type<tc>, window_params = [{transform_indices = @transform_0, window_bounds = array<i64: 8, 20>}, {pipeline_mode = #tpu.pipeline_mode<synchronous>, transform_indices = @transform_1, window_bounds = array<i64: 20, 384>}, {pipeline_mode = #tpu.pipeline_mode<synchronous>, transform_indices = @transform_2, window_bounds = array<i64: 1, 384>}, {pipeline_mode = #tpu.pipeline_mode<synchronous>, transform_indices = @transform_3, window_bounds = array<i64: 3, 128, 128>}, {pipeline_mode = #tpu.pipeline_mode<synchronous>, transform_indices = @transform_4, window_bounds = array<i64: 3, 1, 128>}, {transform_indices = @transform_5, window_bounds = array<i64: 8, 3>}, {transform_indices = @transform_6, window_bounds = array<i64: 3, 8, 128>}]} {
    %c0 = arith.constant 0 : index
    %c0_0 = arith.constant 0 : index
    %0 = vector.load %arg1[%c0, %c0_0] : memref<8x20xf32, #tpu.memory_space<vmem>>, vector<8x20xf32>
    %c0_1 = arith.constant 0 : index
    %c0_2 = arith.constant 0 : index
    %1 = vector.load %arg2[%c0_1, %c0_2] : memref<20x384xf32, #tpu.memory_space<vmem>>, vector<20x384xf32>
    %cst = arith.constant dense<0.000000e+00> : vector<8x384xf32>
    %2 = tpu.matmul %0, %1, %cst {dimension_numbers = #tpu.dot_dimension_numbers<[1], [0], [0], [1], [0, 0, 1, 1], [], []>} : vector<8x20xf32>, vector<20x384xf32>, vector<8x384xf32> -> vector<8x384xf32>
    %c0_3 = arith.constant 0 : index
    %c0_4 = arith.constant 0 : index
    %3 = vector.load %arg3[%c0_3, %c0_4] : memref<1x384xf32, #tpu.memory_space<vmem>>, vector<1x384xf32>
    %4 = vector.broadcast %3 : vector<1x384xf32> to vector<8x384xf32>
    %5 = arith.addf %2, %4 : vector<8x384xf32>
    %cst_5 = arith.constant 0.000000e+00 : f32
    %6 = vector.broadcast %cst_5 : f32 to vector<8x384xf32>
    %7 = arith.maximumf %5, %6 : vector<8x384xf32>
    %8 = vector.extract_strided_slice %7 {offsets = [0, 0], sizes = [8, 128], strides = [1, 1]} : vector<8x384xf32> to vector<8x128xf32>
    %c0_6 = arith.constant 0 : index
    %c0_7 = arith.constant 0 : index
    %c0_8 = arith.constant 0 : index
    %9 = vector.load %arg4[%c0_6, %c0_7, %c0_8] : memref<3x128x128xf32, #tpu.memory_space<vmem>>, vector<1x128x128xf32>
    %10 = vector.shape_cast %9 : vector<1x128x128xf32> to vector<128x128xf32>
    %cst_9 = arith.constant dense<0.000000e+00> : vector<8x128xf32>
    %11 = tpu.matmul %8, %10, %cst_9 {dimension_numbers = #tpu.dot_dimension_numbers<[1], [0], [0], [1], [0, 0, 1, 1], [], []>} : vector<8x128xf32>, vector<128x128xf32>, vector<8x128xf32> -> vector<8x128xf32>
    %c0_10 = arith.constant 0 : index
    %c0_11 = arith.constant 0 : index
    %c0_12 = arith.constant 0 : index
    %12 = vector.load %arg5[%c0_10, %c0_11, %c0_12] : memref<3x1x128xf32, #tpu.memory_space<vmem>>, vector<1x1x128xf32>
    %13 = vector.shape_cast %12 : vector<1x1x128xf32> to vector<1x128xf32>
    %14 = vector.broadcast %13 : vector<1x128xf32> to vector<8x128xf32>
    %15 = arith.addf %11, %14 : vector<8x128xf32>
    %cst_13 = arith.constant dense<0xFF800000> : vector<8xf32>
    %16 = vector.multi_reduction <maximumf>, %15, %cst_13 [1] : vector<8x128xf32> to vector<8xf32>
    %17 = vector.shape_cast %16 : vector<8xf32> to vector<8x1xf32>
    %18 = vector.broadcast %17 : vector<8x1xf32> to vector<8x128xf32>
    %19 = arith.subf %15, %18 : vector<8x128xf32>
    %20 = math.exp %19 : vector<8x128xf32>
    %cst_14 = arith.constant dense<0.000000e+00> : vector<8xf32>
    %21 = vector.multi_reduction <add>, %20, %cst_14 [1] : vector<8x128xf32> to vector<8xf32>
    %22 = vector.shape_cast %21 : vector<8xf32> to vector<8x1xf32>
    %c0_15 = arith.constant 0 : index
    %c0_16 = arith.constant 0 : index
    %23 = vector.load %arg6[%c0_15, %c0_16] : memref<8x3xf32, #tpu.memory_space<vmem>>, vector<8x1xf32>
    %24 = tpu.reciprocal %22 : vector<8x1xf32> -> vector<8x1xf32>
    %25 = arith.mulf %23, %24 : vector<8x1xf32>
    %26 = vector.broadcast %25 : vector<8x1xf32> to vector<8x128xf32>
    %27 = arith.mulf %20, %26 : vector<8x128xf32>
    %c0_17 = arith.constant 0 : index
    %c0_18 = arith.constant 0 : index
    %c0_19 = arith.constant 0 : index
    %28 = vector.load %arg7[%c0_17, %c0_18, %c0_19] : memref<3x8x128xf32, #tpu.memory_space<vmem>>, vector<1x8x128xf32>
    %29 = vector.shape_cast %28 : vector<1x8x128xf32> to vector<8x128xf32>
    %30 = vector.shape_cast %27 : vector<8x128xf32> to vector<1x8x128xf32>
    tpu.vector_store %arg7[%c0_17, %c0_18, %c0_19], %30 {strides = array<i32>} : memref<3x8x128xf32, #tpu.memory_space<vmem>>, vector<1x8x128xf32>,
    %31 = vector.extract_strided_slice %7 {offsets = [0, 128], sizes = [8, 128], strides = [1, 1]} : vector<8x384xf32> to vector<8x128xf32>
    %c1 = arith.constant 1 : index
    %c0_20 = arith.constant 0 : index
    %c0_21 = arith.constant 0 : index
    %32 = vector.load %arg4[%c1, %c0_20, %c0_21] : memref<3x128x128xf32, #tpu.memory_space<vmem>>, vector<1x128x128xf32>
    %33 = vector.shape_cast %32 : vector<1x128x128xf32> to vector<128x128xf32>
    %cst_22 = arith.constant dense<0.000000e+00> : vector<8x128xf32>
    %34 = tpu.matmul %31, %33, %cst_22 {dimension_numbers = #tpu.dot_dimension_numbers<[1], [0], [0], [1], [0, 0, 1, 1], [], []>} : vector<8x128xf32>, vector<128x128xf32>, vector<8x128xf32> -> vector<8x128xf32>
    %c1_23 = arith.constant 1 : index
    %c0_24 = arith.constant 0 : index
    %c0_25 = arith.constant 0 : index
    %35 = vector.load %arg5[%c1_23, %c0_24, %c0_25] : memref<3x1x128xf32, #tpu.memory_space<vmem>>, vector<1x1x128xf32>
    %36 = vector.shape_cast %35 : vector<1x1x128xf32> to vector<1x128xf32>
    %37 = vector.broadcast %36 : vector<1x128xf32> to vector<8x128xf32>
    %38 = arith.addf %34, %37 : vector<8x128xf32>
    %cst_26 = arith.constant dense<0xFF800000> : vector<8xf32>
    %39 = vector.multi_reduction <maximumf>, %38, %cst_26 [1] : vector<8x128xf32> to vector<8xf32>
    %40 = vector.shape_cast %39 : vector<8xf32> to vector<8x1xf32>
    %41 = vector.broadcast %40 : vector<8x1xf32> to vector<8x128xf32>
    %42 = arith.subf %38, %41 : vector<8x128xf32>
    %43 = math.exp %42 : vector<8x128xf32>
    %cst_27 = arith.constant dense<0.000000e+00> : vector<8xf32>
    %44 = vector.multi_reduction <add>, %43, %cst_27 [1] : vector<8x128xf32> to vector<8xf32>
    %45 = vector.shape_cast %44 : vector<8xf32> to vector<8x1xf32>
    %c0_28 = arith.constant 0 : index
    %c1_29 = arith.constant 1 : index
    %46 = vector.load %arg6[%c0_28, %c1_29] : memref<8x3xf32, #tpu.memory_space<vmem>>, vector<8x1xf32>
    %47 = tpu.reciprocal %45 : vector<8x1xf32> -> vector<8x1xf32>
    %48 = arith.mulf %46, %47 : vector<8x1xf32>
    %49 = vector.broadcast %48 : vector<8x1xf32> to vector<8x128xf32>
    %50 = arith.mulf %43, %49 : vector<8x128xf32>
    %c1_30 = arith.constant 1 : index
    %c0_31 = arith.constant 0 : index
    %c0_32 = arith.constant 0 : index
    %51 = vector.load %arg7[%c1_30, %c0_31, %c0_32] : memref<3x8x128xf32, #tpu.memory_space<vmem>>, vector<1x8x128xf32>
    %52 = vector.shape_cast %51 : vector<1x8x128xf32> to vector<8x128xf32>
    %53 = vector.shape_cast %50 : vector<8x128xf32> to vector<1x8x128xf32>
    tpu.vector_store %arg7[%c1_30, %c0_31, %c0_32], %53 {strides = array<i32>} : memref<3x8x128xf32, #tpu.memory_space<vmem>>, vector<1x8x128xf32>,
    %54 = vector.extract_strided_slice %7 {offsets = [0, 256], sizes = [8, 128], strides = [1, 1]} : vector<8x384xf32> to vector<8x128xf32>
    %c2 = arith.constant 2 : index
    %c0_33 = arith.constant 0 : index
    %c0_34 = arith.constant 0 : index
    %55 = vector.load %arg4[%c2, %c0_33, %c0_34] : memref<3x128x128xf32, #tpu.memory_space<vmem>>, vector<1x128x128xf32>
    %56 = vector.shape_cast %55 : vector<1x128x128xf32> to vector<128x128xf32>
    %cst_35 = arith.constant dense<0.000000e+00> : vector<8x128xf32>
    %57 = tpu.matmul %54, %56, %cst_35 {dimension_numbers = #tpu.dot_dimension_numbers<[1], [0], [0], [1], [0, 0, 1, 1], [], []>} : vector<8x128xf32>, vector<128x128xf32>, vector<8x128xf32> -> vector<8x128xf32>
    %c2_36 = arith.constant 2 : index
    %c0_37 = arith.constant 0 : index
    %c0_38 = arith.constant 0 : index
    %58 = vector.load %arg5[%c2_36, %c0_37, %c0_38] : memref<3x1x128xf32, #tpu.memory_space<vmem>>, vector<1x1x128xf32>
    %59 = vector.shape_cast %58 : vector<1x1x128xf32> to vector<1x128xf32>
    %60 = vector.broadcast %59 : vector<1x128xf32> to vector<8x128xf32>
    %61 = arith.addf %57, %60 : vector<8x128xf32>
    %cst_39 = arith.constant dense<0xFF800000> : vector<8xf32>
    %62 = vector.multi_reduction <maximumf>, %61, %cst_39 [1] : vector<8x128xf32> to vector<8xf32>
    %63 = vector.shape_cast %62 : vector<8xf32> to vector<8x1xf32>
    %64 = vector.broadcast %63 : vector<8x1xf32> to vector<8x128xf32>
    %65 = arith.subf %61, %64 : vector<8x128xf32>
    %66 = math.exp %65 : vector<8x128xf32>
    %cst_40 = arith.constant dense<0.000000e+00> : vector<8xf32>
    %67 = vector.multi_reduction <add>, %66, %cst_40 [1] : vector<8x128xf32> to vector<8xf32>
    %68 = vector.shape_cast %67 : vector<8xf32> to vector<8x1xf32>
    %c0_41 = arith.constant 0 : index
    %c2_42 = arith.constant 2 : index
    %69 = vector.load %arg6[%c0_41, %c2_42] : memref<8x3xf32, #tpu.memory_space<vmem>>, vector<8x1xf32>
    %70 = tpu.reciprocal %68 : vector<8x1xf32> -> vector<8x1xf32>
    %71 = arith.mulf %69, %70 : vector<8x1xf32>
    %72 = vector.broadcast %71 : vector<8x1xf32> to vector<8x128xf32>
    %73 = arith.mulf %66, %72 : vector<8x128xf32>
    %c2_43 = arith.constant 2 : index
    %c0_44 = arith.constant 0 : index
    %c0_45 = arith.constant 0 : index
    %74 = vector.load %arg7[%c2_43, %c0_44, %c0_45] : memref<3x8x128xf32, #tpu.memory_space<vmem>>, vector<1x8x128xf32>
    %75 = vector.shape_cast %74 : vector<1x8x128xf32> to vector<8x128xf32>
    %76 = vector.shape_cast %73 : vector<8x128xf32> to vector<1x8x128xf32>
    tpu.vector_store %arg7[%c2_43, %c0_44, %c0_45], %76 {strides = array<i32>} : memref<3x8x128xf32, #tpu.memory_space<vmem>>, vector<1x8x128xf32>,
    return
  }
  func.func @transform_0(%arg0: i32) -> (i32, i32) {
    %c0_i32 = arith.constant 0 : i32
    %c0_i32_0 = arith.constant 0 : i32
    return %arg0, %c0_i32 : i32, i32
  }
  func.func @transform_1(%arg0: i32) -> (i32, i32) {
    %c0_i32 = arith.constant 0 : i32
    %c0_i32_0 = arith.constant 0 : i32
    %c0_i32_1 = arith.constant 0 : i32
    return %c0_i32, %c0_i32_0 : i32, i32
  }
  func.func @transform_2(%arg0: i32) -> (i32, i32) {
    %c0_i32 = arith.constant 0 : i32
    %c0_i32_0 = arith.constant 0 : i32
    %c0_i32_1 = arith.constant 0 : i32
    return %c0_i32, %c0_i32_0 : i32, i32
  }
  func.func @transform_3(%arg0: i32) -> (i32, i32, i32) {
    %c0_i32 = arith.constant 0 : i32
    %c0_i32_0 = arith.constant 0 : i32
    %c0_i32_1 = arith.constant 0 : i32
    %c0_i32_2 = arith.constant 0 : i32
    return %c0_i32, %c0_i32_0, %c0_i32_1 : i32, i32, i32
  }
  func.func @transform_4(%arg0: i32) -> (i32, i32, i32) {
    %c0_i32 = arith.constant 0 : i32
    %c0_i32_0 = arith.constant 0 : i32
    %c0_i32_1 = arith.constant 0 : i32
    %c0_i32_2 = arith.constant 0 : i32
    return %c0_i32, %c0_i32_0, %c0_i32_1 : i32, i32, i32
  }
  func.func @transform_5(%arg0: i32) -> (i32, i32) {
    %c0_i32 = arith.constant 0 : i32
    %c0_i32_0 = arith.constant 0 : i32
    return %arg0, %c0_i32 : i32, i32
  }
  func.func @transform_6(%arg0: i32) -> (i32, i32, i32) {
    %c0_i32 = arith.constant 0 : i32
    %c0_i32_0 = arith.constant 0 : i32
    %c0_i32_1 = arith.constant 0 : i32
    return %c0_i32, %arg0, %c0_i32_0 : i32, i32, i32
  }
}

module attributes {stable_mosaic.version = 11 : i64} {
  func.func @_decoder_kernel(%arg0: i32, %arg1: memref<8x20xf32, #tpu.memory_space<vmem>>, %arg2: memref<20x384xf32, #tpu.memory_space<vmem>>, %arg3: memref<1x384xf32, #tpu.memory_space<vmem>>, %arg4: memref<3x128x128xf32, #tpu.memory_space<vmem>>, %arg5: memref<3x1x128xf32, #tpu.memory_space<vmem>>, %arg6: memref<8x3xf32, #tpu.memory_space<vmem>>, %arg7: memref<3x8x128xf32, #tpu.memory_space<vmem>>) attributes {dimension_semantics = [#tpu.dimension_semantics<parallel>], iteration_bounds = array<i64: 1>, scalar_prefetch = 0 : i64, scratch_operands = 0 : i64, tpu.core_type = #tpu.core_type<tc>, window_params = [{transform_indices = @transform_0, window_bounds = array<i64: 8, 20>}, {pipeline_mode = #tpu.pipeline_mode<synchronous>, transform_indices = @transform_1, window_bounds = array<i64: 20, 384>}, {pipeline_mode = #tpu.pipeline_mode<synchronous>, transform_indices = @transform_2, window_bounds = array<i64: 1, 384>}, {pipeline_mode = #tpu.pipeline_mode<synchronous>, transform_indices = @transform_3, window_bounds = array<i64: 3, 128, 128>}, {pipeline_mode = #tpu.pipeline_mode<synchronous>, transform_indices = @transform_4, window_bounds = array<i64: 3, 1, 128>}, {transform_indices = @transform_5, window_bounds = array<i64: 8, 3>}, {transform_indices = @transform_6, window_bounds = array<i64: 3, 8, 128>}]} {
    %c0 = arith.constant 0 : index
    %c0_0 = arith.constant 0 : index
    %0 = vector.load %arg1[%c0, %c0_0] : memref<8x20xf32, #tpu.memory_space<vmem>>, vector<8x20xf32>
    %c0_1 = arith.constant 0 : index
    %c0_2 = arith.constant 0 : index
    %1 = vector.load %arg2[%c0_1, %c0_2] : memref<20x384xf32, #tpu.memory_space<vmem>>, vector<20x384xf32>
    %cst = arith.constant dense<0.000000e+00> : vector<8x384xf32>
    %2 = tpu.matmul %0, %1, %cst {dimension_numbers = #tpu.dot_dimension_numbers<[1], [0], [0], [1], [0, 0, 1, 1], [], []>} : vector<8x20xf32>, vector<20x384xf32>, vector<8x384xf32> -> vector<8x384xf32>
    %c0_3 = arith.constant 0 : index
    %c0_4 = arith.constant 0 : index
    %3 = vector.load %arg3[%c0_3, %c0_4] : memref<1x384xf32, #tpu.memory_space<vmem>>, vector<1x384xf32>
    %4 = vector.broadcast %3 : vector<1x384xf32> to vector<8x384xf32>
    %5 = arith.addf %2, %4 : vector<8x384xf32>
    %cst_5 = arith.constant 0.000000e+00 : f32
    %6 = vector.broadcast %cst_5 : f32 to vector<8x384xf32>
    %7 = arith.maximumf %5, %6 : vector<8x384xf32>
    %8 = vector.extract_strided_slice %7 {offsets = [0, 0], sizes = [8, 128], strides = [1, 1]} : vector<8x384xf32> to vector<8x128xf32>
    %c0_6 = arith.constant 0 : index
    %c0_7 = arith.constant 0 : index
    %c0_8 = arith.constant 0 : index
    %9 = vector.load %arg4[%c0_6, %c0_7, %c0_8] : memref<3x128x128xf32, #tpu.memory_space<vmem>>, vector<1x128x128xf32>
    %10 = vector.shape_cast %9 : vector<1x128x128xf32> to vector<128x128xf32>
    %cst_9 = arith.constant dense<0.000000e+00> : vector<8x128xf32>
    %11 = tpu.matmul %8, %10, %cst_9 {dimension_numbers = #tpu.dot_dimension_numbers<[1], [0], [0], [1], [0, 0, 1, 1], [], []>} : vector<8x128xf32>, vector<128x128xf32>, vector<8x128xf32> -> vector<8x128xf32>
    %c0_10 = arith.constant 0 : index
    %c0_11 = arith.constant 0 : index
    %c0_12 = arith.constant 0 : index
    %12 = vector.load %arg5[%c0_10, %c0_11, %c0_12] : memref<3x1x128xf32, #tpu.memory_space<vmem>>, vector<1x1x128xf32>
    %13 = vector.shape_cast %12 : vector<1x1x128xf32> to vector<1x128xf32>
    %14 = vector.broadcast %13 : vector<1x128xf32> to vector<8x128xf32>
    %15 = arith.addf %11, %14 : vector<8x128xf32>
    %cst_13 = arith.constant dense<0xFF800000> : vector<8xf32>
    %16 = vector.multi_reduction <maximumf>, %15, %cst_13 [1] : vector<8x128xf32> to vector<8xf32>
    %17 = vector.shape_cast %16 : vector<8xf32> to vector<8x1xf32>
    %18 = vector.broadcast %17 : vector<8x1xf32> to vector<8x128xf32>
    %19 = arith.subf %15, %18 : vector<8x128xf32>
    %20 = math.exp %19 : vector<8x128xf32>
    %cst_14 = arith.constant dense<0.000000e+00> : vector<8xf32>
    %21 = vector.multi_reduction <add>, %20, %cst_14 [1] : vector<8x128xf32> to vector<8xf32>
    %22 = vector.shape_cast %21 : vector<8xf32> to vector<8x1xf32>
    %c0_15 = arith.constant 0 : index
    %c0_16 = arith.constant 0 : index
    %23 = vector.load %arg6[%c0_15, %c0_16] : memref<8x3xf32, #tpu.memory_space<vmem>>, vector<8x1xf32>
    %24 = tpu.reciprocal %22 : vector<8x1xf32> -> vector<8x1xf32>
    %25 = arith.mulf %23, %24 : vector<8x1xf32>
    %26 = vector.broadcast %25 : vector<8x1xf32> to vector<8x128xf32>
    %27 = arith.mulf %20, %26 : vector<8x128xf32>
    %c0_17 = arith.constant 0 : index
    %c0_18 = arith.constant 0 : index
    %c0_19 = arith.constant 0 : index
    %28 = vector.load %arg7[%c0_17, %c0_18, %c0_19] : memref<3x8x128xf32, #tpu.memory_space<vmem>>, vector<1x8x128xf32>
    %29 = vector.shape_cast %28 : vector<1x8x128xf32> to vector<8x128xf32>
    %30 = vector.shape_cast %27 : vector<8x128xf32> to vector<1x8x128xf32>
    tpu.vector_store %arg7[%c0_17, %c0_18, %c0_19], %30 {strides = array<i32>} : memref<3x8x128xf32, #tpu.memory_space<vmem>>, vector<1x8x128xf32>,
    %31 = vector.extract_strided_slice %7 {offsets = [0, 128], sizes = [8, 128], strides = [1, 1]} : vector<8x384xf32> to vector<8x128xf32>
    %c1 = arith.constant 1 : index
    %c0_20 = arith.constant 0 : index
    %c0_21 = arith.constant 0 : index
    %32 = vector.load %arg4[%c1, %c0_20, %c0_21] : memref<3x128x128xf32, #tpu.memory_space<vmem>>, vector<1x128x128xf32>
    %33 = vector.shape_cast %32 : vector<1x128x128xf32> to vector<128x128xf32>
    %cst_22 = arith.constant dense<0.000000e+00> : vector<8x128xf32>
    %34 = tpu.matmul %31, %33, %cst_22 {dimension_numbers = #tpu.dot_dimension_numbers<[1], [0], [0], [1], [0, 0, 1, 1], [], []>} : vector<8x128xf32>, vector<128x128xf32>, vector<8x128xf32> -> vector<8x128xf32>
    %c1_23 = arith.constant 1 : index
    %c0_24 = arith.constant 0 : index
    %c0_25 = arith.constant 0 : index
    %35 = vector.load %arg5[%c1_23, %c0_24, %c0_25] : memref<3x1x128xf32, #tpu.memory_space<vmem>>, vector<1x1x128xf32>
    %36 = vector.shape_cast %35 : vector<1x1x128xf32> to vector<1x128xf32>
    %37 = vector.broadcast %36 : vector<1x128xf32> to vector<8x128xf32>
    %38 = arith.addf %34, %37 : vector<8x128xf32>
    %cst_26 = arith.constant dense<0xFF800000> : vector<8xf32>
    %39 = vector.multi_reduction <maximumf>, %38, %cst_26 [1] : vector<8x128xf32> to vector<8xf32>
    %40 = vector.shape_cast %39 : vector<8xf32> to vector<8x1xf32>
    %41 = vector.broadcast %40 : vector<8x1xf32> to vector<8x128xf32>
    %42 = arith.subf %38, %41 : vector<8x128xf32>
    %43 = math.exp %42 : vector<8x128xf32>
    %cst_27 = arith.constant dense<0.000000e+00> : vector<8xf32>
    %44 = vector.multi_reduction <add>, %43, %cst_27 [1] : vector<8x128xf32> to vector<8xf32>
    %45 = vector.shape_cast %44 : vector<8xf32> to vector<8x1xf32>
    %c0_28 = arith.constant 0 : index
    %c1_29 = arith.constant 1 : index
    %46 = vector.load %arg6[%c0_28, %c1_29] : memref<8x3xf32, #tpu.memory_space<vmem>>, vector<8x1xf32>
    %47 = tpu.reciprocal %45 : vector<8x1xf32> -> vector<8x1xf32>
    %48 = arith.mulf %46, %47 : vector<8x1xf32>
    %49 = vector.broadcast %48 : vector<8x1xf32> to vector<8x128xf32>
    %50 = arith.mulf %43, %49 : vector<8x128xf32>
    %c1_30 = arith.constant 1 : index
    %c0_31 = arith.constant 0 : index
    %c0_32 = arith.constant 0 : index
    %51 = vector.load %arg7[%c1_30, %c0_31, %c0_32] : memref<3x8x128xf32, #tpu.memory_space<vmem>>, vector<1x8x128xf32>
    %52 = vector.shape_cast %51 : vector<1x8x128xf32> to vector<8x128xf32>
    %53 = vector.shape_cast %50 : vector<8x128xf32> to vector<1x8x128xf32>
    tpu.vector_store %arg7[%c1_30, %c0_31, %c0_32], %53 {strides = array<i32>} : memref<3x8x128xf32, #tpu.memory_space<vmem>>, vector<1x8x128xf32>,
    %54 = vector.extract_strided_slice %7 {offsets = [0, 256], sizes = [8, 128], strides = [1, 1]} : vector<8x384xf32> to vector<8x128xf32>
    %c2 = arith.constant 2 : index
    %c0_33 = arith.constant 0 : index
    %c0_34 = arith.constant 0 : index
    %55 = vector.load %arg4[%c2, %c0_33, %c0_34] : memref<3x128x128xf32, #tpu.memory_space<vmem>>, vector<1x128x128xf32>
    %56 = vector.shape_cast %55 : vector<1x128x128xf32> to vector<128x128xf32>
    %cst_35 = arith.constant dense<0.000000e+00> : vector<8x128xf32>
    %57 = tpu.matmul %54, %56, %cst_35 {dimension_numbers = #tpu.dot_dimension_numbers<[1], [0], [0], [1], [0, 0, 1, 1], [], []>} : vector<8x128xf32>, vector<128x128xf32>, vector<8x128xf32> -> vector<8x128xf32>
    %c2_36 = arith.constant 2 : index
    %c0_37 = arith.constant 0 : index
    %c0_38 = arith.constant 0 : index
    %58 = vector.load %arg5[%c2_36, %c0_37, %c0_38] : memref<3x1x128xf32, #tpu.memory_space<vmem>>, vector<1x1x128xf32>
    %59 = vector.shape_cast %58 : vector<1x1x128xf32> to vector<1x128xf32>
    %60 = vector.broadcast %59 : vector<1x128xf32> to vector<8x128xf32>
    %61 = arith.addf %57, %60 : vector<8x128xf32>
    %cst_39 = arith.constant dense<0xFF800000> : vector<8xf32>
    %62 = vector.multi_reduction <maximumf>, %61, %cst_39 [1] : vector<8x128xf32> to vector<8xf32>
    %63 = vector.shape_cast %62 : vector<8xf32> to vector<8x1xf32>
    %64 = vector.broadcast %63 : vector<8x1xf32> to vector<8x128xf32>
    %65 = arith.subf %61, %64 : vector<8x128xf32>
    %66 = math.exp %65 : vector<8x128xf32>
    %cst_40 = arith.constant dense<0.000000e+00> : vector<8xf32>
    %67 = vector.multi_reduction <add>, %66, %cst_40 [1] : vector<8x128xf32> to vector<8xf32>
    %68 = vector.shape_cast %67 : vector<8xf32> to vector<8x1xf32>
    %c0_41 = arith.constant 0 : index
    %c2_42 = arith.constant 2 : index
    %69 = vector.load %arg6[%c0_41, %c2_42] : memref<8x3xf32, #tpu.memory_space<vmem>>, vector<8x1xf32>
    %70 = tpu.reciprocal %68 : vector<8x1xf32> -> vector<8x1xf32>
    %71 = arith.mulf %69, %70 : vector<8x1xf32>
    %72 = vector.broadcast %71 : vector<8x1xf32> to vector<8x128xf32>
    %73 = arith.mulf %66, %72 : vector<8x128xf32>
    %c2_43 = arith.constant 2 : index
    %c0_44 = arith.constant 0 : index
    %c0_45 = arith.constant 0 : index
    %74 = vector.load %arg7[%c2_43, %c0_44, %c0_45] : memref<3x8x128xf32, #tpu.memory_space<vmem>>, vector<1x8x128xf32>
    %75 = vector.shape_cast %74 : vector<1x8x128xf32> to vector<8x128xf32>
    %76 = vector.shape_cast %73 : vector<8x128xf32> to vector<1x8x128xf32>
    tpu.vector_store %arg7[%c2_43, %c0_44, %c0_45], %76 {strides = array<i32>} : memref<3x8x128xf32, #tpu.memory_space<vmem>>, vector<1x8x128xf32>,
    return
  }
  func.func @transform_0(%arg0: i32) -> (i32, i32) {
    %c0_i32 = arith.constant 0 : i32
    %c0_i32_0 = arith.constant 0 : i32
    return %arg0, %c0_i32 : i32, i32
  }
  func.func @transform_1(%arg0: i32) -> (i32, i32) {
    %c0_i32 = arith.constant 0 : i32
    %c0_i32_0 = arith.constant 0 : i32
    %c0_i32_1 = arith.constant 0 : i32
    return %c0_i32, %c0_i32_0 : i32, i32
  }
  func.func @transform_2(%arg0: i32) -> (i32, i32) {
    %c0_i32 = arith.constant 0 : i32
    %c0_i32_0 = arith.constant 0 : i32
    %c0_i32_1 = arith.constant 0 : i32
    return %c0_i32, %c0_i32_0 : i32, i32
  }
  func.func @transform_3(%arg0: i32) -> (i32, i32, i32) {
    %c0_i32 = arith.constant 0 : i32
    %c0_i32_0 = arith.constant 0 : i32
    %c0_i32_1 = arith.constant 0 : i32
    %c0_i32_2 = arith.constant 0 : i32
    return %c0_i32, %c0_i32_0, %c0_i32_1 : i32, i32, i32
  }
  func.func @transform_4(%arg0: i32) -> (i32, i32, i32) {
    %c0_i32 = arith.constant 0 : i32
    %c0_i32_0 = arith.constant 0 : i32
    %c0_i32_1 = arith.constant 0 : i32
    %c0_i32_2 = arith.constant 0 : i32
    return %c0_i32, %c0_i32_0, %c0_i32_1 : i32, i32, i32
  }
  func.func @transform_5(%arg0: i32) -> (i32, i32) {
    %c0_i32 = arith.constant 0 : i32
    %c0_i32_0 = arith.constant 0 : i32
    return %arg0, %c0_i32 : i32, i32
  }
  func.func @transform_6(%arg0: i32) -> (i32, i32, i32) {
    %c0_i32 = arith.constant 0 : i32
    %c0_i32_0 = arith.constant 0 : i32
    %c0_i32_1 = arith.constant 0 : i32
    return %c0_i32, %arg0, %c0_i32_0 : i32, i32, i32
  }
}

</mosaic_0001>

<llo_original>
// kernel: tpu_custom_call.1
$region0: #{tpu_custom_call.1}
  #allocation0 [shape = 'u32[]', space=smem, size = 0x4, offset = 0x4, fixed_abs, tag = 'smem constant byte address 0x4 - core index']
  #allocation1 [shape = 'u32[144,128]{1,0:T(1,128)}', space=vmem, size = 0x12000, scoped, tag = 'internal scratch']
  %s0 = inlined_call_operand.hbm [shape: f32[8,20], index: 0, kind: input, shape index: {}]
  %s1 = inlined_call_operand.hbm [shape: f32[20,384], index: 1, kind: input, shape index: {}]
  %s2 = inlined_call_operand.hbm [shape: f32[1,384], index: 2, kind: input, shape index: {}]
  %s3 = inlined_call_operand.hbm [shape: f32[3,128,128], index: 3, kind: input, shape index: {}]
  %s4 = inlined_call_operand.hbm [shape: f32[3,1,128], index: 4, kind: input, shape index: {}]
  %s5 = inlined_call_operand.hbm [shape: f32[8,3], index: 5, kind: input, shape index: {}]
  %s6 = inlined_call_operand.hbm [shape: f32[3,8,128], index: 6, kind: output, shape index: {}]
  %s7 = sld [smem:[#allocation0]]
  $region58: #{tpu_custom_call.1} parent=0
    _
  %s9 = ssub.s32 1, %s7
  %s10 = scalar_select 0, %s9, %s7
  $region1: #{tpu_custom_call.1} parent=0
    #allocation2 [shape = 'u8[4096]{0}', space=vmem, size = 0x1000, scoped, tag = 'input window, operand 0, single buffered']
    #allocation3 [shape = 's32[1]{0}', space=sflag, size = 0x4, scoped, tag = 'scoped memory for tpu_custom_call.1']
    #allocation4 [shape = 's32[1]{0}', space=sflag, size = 0x4, scoped, tag = 'scoped memory for tpu_custom_call.1']
    #allocation5 [shape = 'u8[36864]{0}', space=vmem, size = 0x9000, scoped, tag = 'input window, operand 1, single buffered']
    #allocation6 [shape = 's32[1]{0}', space=sflag, size = 0x4, scoped, tag = 'scoped memory for tpu_custom_call.1']
    #allocation7 [shape = 'u8[1536]{0}', space=vmem, size = 0x800, scoped, tag = 'input window, operand 2, single buffered']
    #allocation8 [shape = 'u8[196608]{0}', space=vmem, size = 0x30000, scoped, tag = 'input window, operand 3, single buffered']
    #allocation9 [shape = 's32[1]{0}', space=sflag, size = 0x4, scoped, tag = 'scoped memory for tpu_custom_call.1']
    #allocation10 [shape = 'u8[1536]{0}', space=vmem, size = 0x800, scoped, tag = 'input window, operand 4, single buffered']
    #allocation11 [shape = 'u8[4096]{0}', space=vmem, size = 0x1000, scoped, tag = 'input window, operand 5, single buffered']
    #allocation12 [shape = 's32[1]{0}', space=sflag, size = 0x4, scoped, tag = 'scoped memory for tpu_custom_call.1']
    #allocation13 [shape = 'u8[12288]{0}', space=vmem, size = 0x3000, scoped, tag = 'output window, operand 0, single buffered']
    %11 = vsyncpa [#allocation3], 0
    %12 = vsyncpa [#allocation6], 0
    %13 = vsyncpa [#allocation9], 0
    %14 = vsyncpa [#allocation12], 0
    %15 = vsyncpa [#allocation4], 0
    // Predicated region
    $region2: #{tpu_custom_call.1} parent=1 // pred_check
      _
    $region3: #{tpu_custom_call.1} parent=1 // pred_check_branch
      %17 = sbr.rel (0) target = $region5
    $region4: #{tpu_custom_call.1} parent=1 // pred_region
      %s19 = ssub.s32 128, 128
      %20 = vsyncadd [#allocation3], %s19
      %s22 = sshll.u32 [#allocation2], 4
      %s23 = int_to_ptr.vmem [resolvable:$true] %s22
      %25 = dma.hbm_to_vmem [thread:$0]  %s0, 128, %s23, [#allocation3]
    $region5: #{tpu_custom_call.1} parent=1 // pred_fallthru
      _
    // Predicated region
    $region6: #{tpu_custom_call.1} parent=1 // pred_check
      _
    $region7: #{tpu_custom_call.1} parent=1 // pred_check_branch
      %27 = sbr.rel (0) target = $region9
    $region8: #{tpu_custom_call.1} parent=1 // pred_region
      %s29 = ssub.s32 1152, 1152
      %30 = vsyncadd [#allocation6], %s29
      %s31 = sshll.u32 [#allocation5], 4
      %s32 = int_to_ptr.vmem [resolvable:$true] %s31
      %37 = dma.hbm_to_vmem [thread:$0]  %s1, 1152, %s32, [#allocation6], 384, 384, 24
    $region9: #{tpu_custom_call.1} parent=1 // pred_fallthru
      _
    // Predicated region
    $region10: #{tpu_custom_call.1} parent=1 // pred_check
      _
    $region11: #{tpu_custom_call.1} parent=1 // pred_check_branch
      %39 = sbr.rel (0) target = $region13
    $region12: #{tpu_custom_call.1} parent=1 // pred_region
      %s41 = ssub.s32 48, 48
      %42 = vsyncadd [#allocation6], %s41
      %s44 = sshll.u32 [#allocation7], 4
      %s45 = int_to_ptr.vmem [resolvable:$true] %s44
      %47 = dma.hbm_to_vmem [thread:$0]  %s2, 48, %s45, [#allocation6]
    $region13: #{tpu_custom_call.1} parent=1 // pred_fallthru
      _
    // Predicated region
    $region14: #{tpu_custom_call.1} parent=1 // pred_check
      _
    $region15: #{tpu_custom_call.1} parent=1 // pred_check_branch
      %49 = sbr.rel (0) target = $region17
    $region16: #{tpu_custom_call.1} parent=1 // pred_region
      %s51 = ssub.s32 6144, 6144
      %52 = vsyncadd [#allocation9], %s51
      %s53 = sshll.u32 [#allocation8], 4
      %s54 = int_to_ptr.vmem [resolvable:$true] %s53
      %59 = dma.hbm_to_vmem [thread:$0]  %s3, 6144, %s54, [#allocation9], 128, 128, 8
    $region17: #{tpu_custom_call.1} parent=1 // pred_fallthru
      _
    // Predicated region
    $region18: #{tpu_custom_call.1} parent=1 // pred_check
      _
    $region19: #{tpu_custom_call.1} parent=1 // pred_check_branch
      %61 = sbr.rel (0) target = $region21
    $region20: #{tpu_custom_call.1} parent=1 // pred_region
      %s63 = ssub.s32 48, 48
      %64 = vsyncadd [#allocation9], %s63
      %s65 = sshll.u32 [#allocation10], 4
      %s66 = int_to_ptr.vmem [resolvable:$true] %s65
      %71 = dma.hbm_to_vmem [thread:$0]  %s4, 48, %s66, [#allocation9], 16, 16, 1
    $region21: #{tpu_custom_call.1} parent=1 // pred_fallthru
      _
    // Predicated region
    $region22: #{tpu_custom_call.1} parent=1 // pred_check
      _
    $region23: #{tpu_custom_call.1} parent=1 // pred_check_branch
      %73 = sbr.rel (0) target = $region25
    $region24: #{tpu_custom_call.1} parent=1 // pred_region
      %s75 = ssub.s32 128, 128
      %76 = vsyncadd [#allocation12], %s75
      %s78 = sshll.u32 [#allocation11], 4
      %s79 = int_to_ptr.vmem [resolvable:$true] %s78
      %81 = dma.hbm_to_vmem [thread:$0]  %s5, 128, %s79, [#allocation12]
    $region25: #{tpu_custom_call.1} parent=1 // pred_fallthru
      _
    // Predicated region
    $region26: #{tpu_custom_call.1} parent=1 // pred_check
      _
    $region27: #{tpu_custom_call.1} parent=1 // pred_check_branch
      %83 = sbr.rel (0) target = $region29
    $region28: #{tpu_custom_call.1} parent=1 // pred_region
      %84 = dma.done [#allocation3], 128
    $region29: #{tpu_custom_call.1} parent=1 // pred_fallthru
      _
    // Predicated region
    $region30: #{tpu_custom_call.1} parent=1 // pred_check
      _
    $region31: #{tpu_custom_call.1} parent=1 // pred_check_branch
      %86 = sbr.rel (0) target = $region33
    $region32: #{tpu_custom_call.1} parent=1 // pred_region
      %87 = dma.done [#allocation6], 1152
    $region33: #{tpu_custom_call.1} parent=1 // pred_fallthru
      _
    // Predicated region
    $region34: #{tpu_custom_call.1} parent=1 // pred_check
      _
    $region35: #{tpu_custom_call.1} parent=1 // pred_check_branch
      %89 = sbr.rel (0) target = $region37
    $region36: #{tpu_custom_call.1} parent=1 // pred_region
      %90 = dma.done [#allocation6], 48
    $region37: #{tpu_custom_call.1} parent=1 // pred_fallthru
      _
    // Predicated region
    $region38: #{tpu_custom_call.1} parent=1 // pred_check
      _
    $region39: #{tpu_custom_call.1} parent=1 // pred_check_branch
      %92 = sbr.rel (0) target = $region41
    $region40: #{tpu_custom_call.1} parent=1 // pred_region
      %93 = dma.done [#allocation9], 6144
    $region41: #{tpu_custom_call.1} parent=1 // pred_fallthru
      _
    // Predicated region
    $region42: #{tpu_custom_call.1} parent=1 // pred_check
      _
    $region43: #{tpu_custom_call.1} parent=1 // pred_check_branch
      %95 = sbr.rel (0) target = $region45
    $region44: #{tpu_custom_call.1} parent=1 // pred_region
      %96 = dma.done [#allocation9], 48
    $region45: #{tpu_custom_call.1} parent=1 // pred_fallthru
      _
    // Predicated region
    $region46: #{tpu_custom_call.1} parent=1 // pred_check
      _
    $region47: #{tpu_custom_call.1} parent=1 // pred_check_branch
      %98 = sbr.rel (0) target = $region49
    $region48: #{tpu_custom_call.1} parent=1 // pred_region
      %99 = dma.done [#allocation12], 128
    $region49: #{tpu_custom_call.1} parent=1 // pred_fallthru
      _
    %v100 = vld [vmem:[#allocation2] sm:$0xff]
    %v101 = vld [vmem:[#allocation5] sm:$0xff]
    %v102 = vld [vmem:[#allocation5 + $0x8] sm:$0xff]
    %v103 = vld [vmem:[#allocation5 + $0x10] sm:$0xff]
    %v104 = vld [vmem:[#allocation5 + $0x18] sm:$0xff]
    %v105 = vld [vmem:[#allocation5 + $0x20] sm:$0xff]
    %v106 = vld [vmem:[#allocation5 + $0x28] sm:$0xff]
    %v107 = vld [vmem:[#allocation5 + $0x30] sm:$0xf]
    %v108 = vld [vmem:[#allocation5 + $0x38] sm:$0xf]
    %v109 = vld [vmem:[#allocation5 + $0x40] sm:$0xf]
    %v110 = vld [vmem:[#allocation7] sm:$0x7]
    %v112 = vlaneseq
    %v113 = vshrl.u32 %v112, 7
    %v114 = vsub.s32 0, %v113
    %v115 = vrot.slane %v110, %v114
    %v116 = vlaneseq
    %v117 = vshrl.u32 %v116, 7
    %v118 = vsub.s32 1, %v117
    %v119 = vrot.slane %v110, %v118
    %v120 = vlaneseq
    %v121 = vshrl.u32 %v120, 7
    %v122 = vsub.s32 2, %v121
    %v123 = vrot.slane %v110, %v122
    %vm127 = vcmask 162816
    %v129 = vsel %vm127, %v100, 0
    %vm131 = vcmask 1043456
    %v133 = vsel %vm131, %v107, 0
    %v136 = vsel %vm131, %v108, 0
    %v139 = vsel %vm131, %v109, 0
    %141 = vmatprep.subr.mxu0 %v102
    %142 = vmatpush1.msra.mxu0 %v101
    %143 = vmatprep.subr.mxu0 %v105
    %144 = vmatpush1.msra.mxu0 %v104
    %145 = vmatprep.subr.mxu0 %v136
    %146 = vmatpush1.msra.mxu0 %v133
    %147 = vmatprep.subr.mxu0 0.0
    %148 = vmatpush1.msra.mxu0 0.0
    %149 = vmatprep.subr.mxu0 0.0
    %150 = vmatpush1.msra.mxu0 0.0
    %151 = vmatprep.subr.mxu0 0.0
    %152 = vmatpush1.msra.mxu0 0.0
    %153 = vmatprep.subr.mxu0 0.0
    %154 = vmatpush1.msra.mxu0 0.0
    %155 = vmatprep.subr.mxu0 0.0
    %156 = vmatpush1.msra.mxu0 0.0
    %157 = vmatprep.subr.mxu0 0.0
    %158 = vmatpush1.msra.mxu0 0.0
    %159 = vmatprep.subr.mxu0 0.0
    %160 = vmatpush1.msra.mxu0 0.0
    %161 = vmatprep.subr.mxu0 0.0
    %162 = vmatpush1.msra.mxu0 0.0
    %163 = vmatprep.subr.mxu0 0.0
    %164 = vmatpush1.msra.mxu0 0.0
    %165 = vmatprep.subr.mxu0 0.0
    %166 = vmatpush1.msra.mxu0 0.0
    %167 = vmatprep.subr.mxu0 0.0
    %168 = vmatpush1.msra.mxu0 0.0
    %169 = vmatprep.subr.mxu0 0.0
    %170 = vmatpush1.msra.mxu0 0.0
    %171 = vmatprep.subr.mxu0 0.0
    %172 = vmatpush1.msra.mxu0 0.0
    %173 = vmatprep.subr.mxu0 0.0
    %174 = vmatpush1.msra.mxu0 0.0
    %175 = vmatprep.subr.mxu0 0.0
    %176 = vmatpush1.msra.mxu0 0.0
    %177 = vmatprep.subr.mxu0 0.0
    %178 = vmatpush1.msra.mxu0 0.0
    %179 = vmatprep.subr.mxu0 0.0
    %180 = vmatpush1.msra.mxu0 0.0
    %181 = vmatprep.subr.mxu0 0.0
    %182 = vmatpush1.msra.mxu0 0.0
    %183 = vmatprep.subr.mxu0 0.0
    %184 = vmatpush1.msra.mxu0 0.0
    %185 = vmatprep.subr.mxu0 0.0
    %186 = vmatpush1.msra.mxu0 0.0
    %187 = vmatprep.subr.mxu0 0.0
    %188 = vmatpush1.msra.mxu0 0.0
    %189 = vmatprep.subr.mxu0 0.0
    %190 = vmatpush1.msra.mxu0 0.0
    %191 = vmatprep.subr.mxu0 0.0
    %192 = vmatpush1.msra.mxu0 0.0
    %193 = vmatprep.subr.mxu0 0.0
    %194 = vmatpush1.msra.mxu0 0.0
    %195 = vmatprep.subr.mxu0 0.0
    %196 = vmatpush1.msra.mxu0 0.0
    %197 = vmatprep.subr.mxu0 0.0
    %198 = vmatpush1.msra.mxu0 0.0
    %199 = vmatprep.subr.mxu0 0.0
    %200 = vmatpush1.msra.mxu0 0.0
    %201 = vmatprep.subr.mxu0 0.0
    %202 = vmatpush1.msra.mxu0 0.0
    %203 = vmatprep.subr.mxu0 0.0
    %204 = vmatpush1.msra.mxu0 0.0
    %205 = vmatprep.mubr.f32.mxu0 0.0
    %206 = vmatmul.mubr.f32.gmra.mrb[0].mxu0 %v129
    %v207 = vpop.f32.mrb[0].mxu0
    %v208 = vadd.f32 %v115, %v207
    %v209 = vpop.f32.mrb[0].mxu0
    %v210 = vadd.f32 %v119, %v209
    %211 = vdwg.mxu0
    %212 = vmatprep.subr.mxu0 0.0
    %213 = vmatpush1.msra.mxu0 %v103
    %214 = vmatprep.subr.mxu0 0.0
    %215 = vmatpush1.msra.mxu0 %v106
    %216 = vmatprep.subr.mxu0 0.0
    %217 = vmatpush1.msra.mxu0 %v139
    %218 = vmatprep.subr.mxu0 0.0
    %219 = vmatpush1.msra.mxu0 0.0
    %220 = vmatprep.subr.mxu0 0.0
    %221 = vmatpush1.msra.mxu0 0.0
    %222 = vmatprep.subr.mxu0 0.0
    %223 = vmatpush1.msra.mxu0 0.0
    %224 = vmatprep.subr.mxu0 0.0
    %225 = vmatpush1.msra.mxu0 0.0
    %226 = vmatprep.subr.mxu0 0.0
    %227 = vmatpush1.msra.mxu0 0.0
    %228 = vmatprep.subr.mxu0 0.0
    %229 = vmatpush1.msra.mxu0 0.0
    %230 = vmatprep.subr.mxu0 0.0
    %231 = vmatpush1.msra.mxu0 0.0
    %232 = vmatprep.subr.mxu0 0.0
    %233 = vmatpush1.msra.mxu0 0.0
    %234 = vmatprep.subr.mxu0 0.0
    %235 = vmatpush1.msra.mxu0 0.0
    %236 = vmatprep.subr.mxu0 0.0
    %237 = vmatpush1.msra.mxu0 0.0
    %238 = vmatprep.subr.mxu0 0.0
    %239 = vmatpush1.msra.mxu0 0.0
    %240 = vmatprep.subr.mxu0 0.0
    %241 = vmatpush1.msra.mxu0 0.0
    %242 = vmatprep.subr.mxu0 0.0
    %243 = vmatpush1.msra.mxu0 0.0
    %244 = vmatprep.subr.mxu0 0.0
    %245 = vmatpush1.msra.mxu0 0.0
    %246 = vmatprep.subr.mxu0 0.0
    %247 = vmatpush1.msra.mxu0 0.0
    %248 = vmatprep.subr.mxu0 0.0
    %249 = vmatpush1.msra.mxu0 0.0
    %250 = vmatprep.subr.mxu0 0.0
    %251 = vmatpush1.msra.mxu0 0.0
    %252 = vmatprep.subr.mxu0 0.0
    %253 = vmatpush1.msra.mxu0 0.0
    %254 = vmatprep.subr.mxu0 0.0
    %255 = vmatpush1.msra.mxu0 0.0
    %256 = vmatprep.subr.mxu0 0.0
    %257 = vmatpush1.msra.mxu0 0.0
    %258 = vmatprep.subr.mxu0 0.0
    %259 = vmatpush1.msra.mxu0 0.0
    %260 = vmatprep.subr.mxu0 0.0
    %261 = vmatpush1.msra.mxu0 0.0
    %262 = vmatprep.subr.mxu0 0.0
    %263 = vmatpush1.msra.mxu0 0.0
    %264 = vmatprep.subr.mxu0 0.0
    %265 = vmatpush1.msra.mxu0 0.0
    %266 = vmatprep.subr.mxu0 0.0
    %267 = vmatpush1.msra.mxu0 0.0
    %268 = vmatprep.subr.mxu0 0.0
    %269 = vmatpush1.msra.mxu0 0.0
    %270 = vmatprep.subr.mxu0 0.0
    %271 = vmatpush1.msra.mxu0 0.0
    %272 = vmatprep.subr.mxu0 0.0
    %273 = vmatpush1.msra.mxu0 0.0
    %274 = vmatprep.subr.mxu0 0.0
    %275 = vmatpush1.msra.mxu0 0.0
    %276 = vmatprep.mubr.f32.mxu0 0.0
    %277 = vmatmul.mubr.f32.gmra.mrb[0].mxu0 %v129
    %v278 = vpop.f32.mrb[0].mxu0
    %v279 = vadd.f32 %v123, %v278
    %v280 = vpop.f32.mrb[0].mxu0
    %281 = vdwg.mxu0
    %v282 = vmax.f32 %v208, 0.0
    %v283 = vmax.f32 %v210, 0.0
    %v284 = vmax.f32 %v279, 0.0
    %v285 = vld [vmem:[#allocation8] sm:$0xff]
    %v286 = vld [vmem:[#allocation8 + $0x8] sm:$0xff]
    %v287 = vld [vmem:[#allocation8 + $0x10] sm:$0xff]
    %v288 = vld [vmem:[#allocation8 + $0x18] sm:$0xff]
    %v289 = vld [vmem:[#allocation8 + $0x20] sm:$0xff]
    %v290 = vld [vmem:[#allocation8 + $0x28] sm:$0xff]
    %v291 = vld [vmem:[#allocation8 + $0x30] sm:$0xff]
    %v292 = vld [vmem:[#allocation8 + $0x38] sm:$0xff]
    %v293 = vld [vmem:[#allocation8 + $0x40] sm:$0xff]
    %v294 = vld [vmem:[#allocation8 + $0x48] sm:$0xff]
    %v295 = vld [vmem:[#allocation8 + $0x50] sm:$0xff]
    %v296 = vld [vmem:[#allocation8 + $0x58] sm:$0xff]
    %v297 = vld [vmem:[#allocation8 + $0x60] sm:$0xff]
    %v298 = vld [vmem:[#allocation8 + $0x68] sm:$0xff]
    %v299 = vld [vmem:[#allocation8 + $0x70] sm:$0xff]
    %v300 = vld [vmem:[#allocation8 + $0x78] sm:$0xff]
    %v301 = vld [vmem:[#allocation10] sm:$0x1]
    %v303 = vlaneseq
    %v304 = vshrl.u32 %v303, 7
    %v305 = vsub.s32 0, %v304
    %v306 = vrot.slane %v301, %v305
    %308 = vmatprep.subr.mxu0 0.0
    %309 = vmatpush1.msra.mxu0 %v285
    %310 = vmatprep.subr.mxu0 0.0
    %311 = vmatpush1.msra.mxu0 %v286
    %312 = vmatprep.subr.mxu0 0.0
    %313 = vmatpush1.msra.mxu0 %v287
    %314 = vmatprep.subr.mxu0 0.0
    %315 = vmatpush1.msra.mxu0 %v288
    %316 = vmatprep.subr.mxu0 0.0
    %317 = vmatpush1.msra.mxu0 %v289
    %318 = vmatprep.subr.mxu0 0.0
    %319 = vmatpush1.msra.mxu0 %v290
    %320 = vmatprep.subr.mxu0 0.0
    %321 = vmatpush1.msra.mxu0 %v291
    %322 = vmatprep.subr.mxu0 0.0
    %323 = vmatpush1.msra.mxu0 %v292
    %324 = vmatprep.subr.mxu0 0.0
    %325 = vmatpush1.msra.mxu0 %v293
    %326 = vmatprep.subr.mxu0 0.0
    %327 = vmatpush1.msra.mxu0 %v294
    %328 = vmatprep.subr.mxu0 0.0
    %329 = vmatpush1.msra.mxu0 %v295
    %330 = vmatprep.subr.mxu0 0.0
    %331 = vmatpush1.msra.mxu0 %v296
    %332 = vmatprep.subr.mxu0 0.0
    %333 = vmatpush1.msra.mxu0 %v297
    %334 = vmatprep.subr.mxu0 0.0
    %335 = vmatpush1.msra.mxu0 %v298
    %336 = vmatprep.subr.mxu0 0.0
    %337 = vmatpush1.msra.mxu0 %v299
    %338 = vmatprep.subr.mxu0 0.0
    %339 = vmatpush1.msra.mxu0 %v300
    %340 = vmatprep.subr.mxu0 0.0
    %341 = vmatpush1.msra.mxu0 0.0
    %342 = vmatprep.subr.mxu0 0.0
    %343 = vmatpush1.msra.mxu0 0.0
    %344 = vmatprep.subr.mxu0 0.0
    %345 = vmatpush1.msra.mxu0 0.0
    %346 = vmatprep.subr.mxu0 0.0
    %347 = vmatpush1.msra.mxu0 0.0
    %348 = vmatprep.subr.mxu0 0.0
    %349 = vmatpush1.msra.mxu0 0.0
    %350 = vmatprep.subr.mxu0 0.0
    %351 = vmatpush1.msra.mxu0 0.0
    %352 = vmatprep.subr.mxu0 0.0
    %353 = vmatpush1.msra.mxu0 0.0
    %354 = vmatprep.subr.mxu0 0.0
    %355 = vmatpush1.msra.mxu0 0.0
    %356 = vmatprep.subr.mxu0 0.0
    %357 = vmatpush1.msra.mxu0 0.0
    %358 = vmatprep.subr.mxu0 0.0
    %359 = vmatpush1.msra.mxu0 0.0
    %360 = vmatprep.subr.mxu0 0.0
    %361 = vmatpush1.msra.mxu0 0.0
    %362 = vmatprep.subr.mxu0 0.0
    %363 = vmatpush1.msra.mxu0 0.0
    %364 = vmatprep.subr.mxu0 0.0
    %365 = vmatpush1.msra.mxu0 0.0
    %366 = vmatprep.subr.mxu0 0.0
    %367 = vmatpush1.msra.mxu0 0.0
    %368 = vmatprep.subr.mxu0 0.0
    %369 = vmatpush1.msra.mxu0 0.0
    %370 = vmatprep.subr.mxu0 0.0
    %371 = vmatpush1.msra.mxu0 0.0
    %372 = vmatprep.mubr.f32.mxu0 0.0
    %373 = vmatmul.mubr.f32.gmra.mrb[0].mxu0 %v282
    %v374 = vpop.f32.mrb[0].mxu0
    %v375 = vadd.f32 %v306, %v374
    %v376 = vpop.f32.mrb[0].mxu0
    %377 = vdwg.mxu0
    %378 = vmax.xlane.f32.xlu0 %v375
    %v379 = vpop.xlane.xlu0 %378
    %v380 = vsub.f32 %v375, %v379
    %v381 = vmul.f32 %v380, 1.442695
    %v382 = vpow.pop %v381
    %383 = vadd.xlane.f32.xlu0 %v382
    %v384 = vpop.xlane.xlu0 %383
    %v385 = vld [vmem:[#allocation11] sm:$0xff]
    %v386 = vrcp.pop %v384
    %v387 = vmul.f32 %v385, %v386
    %389 = vset.pattern.permute.xlu0 0
    %390 = vperm.xlu0 %389, %v387
    %v391 = vpop.permute.xlu0 %390
    %v393 = vmul.f32 %v382, %v391
    %394 = vst [vmem:[#allocation13] sm:$0xff] %v393
    %s395 = scalar_lea.vmem [#allocation8], 128
    %v396 = vld [vmem:[%s395] sm:$0xff]
    %v397 = vld [vmem:[%s395 + $0x8] sm:$0xff]
    %v398 = vld [vmem:[%s395 + $0x10] sm:$0xff]
    %v399 = vld [vmem:[%s395 + $0x18] sm:$0xff]
    %v400 = vld [vmem:[%s395 + $0x20] sm:$0xff]
    %v401 = vld [vmem:[%s395 + $0x28] sm:$0xff]
    %v402 = vld [vmem:[%s395 + $0x30] sm:$0xff]
    %v403 = vld [vmem:[%s395 + $0x38] sm:$0xff]
    %v404 = vld [vmem:[%s395 + $0x40] sm:$0xff]
    %v405 = vld [vmem:[%s395 + $0x48] sm:$0xff]
    %v406 = vld [vmem:[%s395 + $0x50] sm:$0xff]
    %v407 = vld [vmem:[%s395 + $0x58] sm:$0xff]
    %v408 = vld [vmem:[%s395 + $0x60] sm:$0xff]
    %v409 = vld [vmem:[%s395 + $0x68] sm:$0xff]
    %v410 = vld [vmem:[%s395 + $0x70] sm:$0xff]
    %v411 = vld [vmem:[%s395 + $0x78] sm:$0xff]
    %s412 = scalar_lea.vmem [#allocation10], 1
    %v413 = vld [vmem:[%s412] sm:$0x1]
    %v415 = vlaneseq
    %v416 = vshrl.u32 %v415, 7
    %v417 = vsub.s32 0, %v416
    %v418 = vrot.slane %v413, %v417
    %420 = vmatprep.subr.mxu0 0.0
    %421 = vmatpush1.msra.mxu0 %v396
    %422 = vmatprep.subr.mxu0 0.0
    %423 = vmatpush1.msra.mxu0 %v397
    %424 = vmatprep.subr.mxu0 0.0
    %425 = vmatpush1.msra.mxu0 %v398
    %426 = vmatprep.subr.mxu0 0.0
    %427 = vmatpush1.msra.mxu0 %v399
    %428 = vmatprep.subr.mxu0 0.0
    %429 = vmatpush1.msra.mxu0 %v400
    %430 = vmatprep.subr.mxu0 0.0
    %431 = vmatpush1.msra.mxu0 %v401
    %432 = vmatprep.subr.mxu0 0.0
    %433 = vmatpush1.msra.mxu0 %v402
    %434 = vmatprep.subr.mxu0 0.0
    %435 = vmatpush1.msra.mxu0 %v403
    %436 = vmatprep.subr.mxu0 0.0
    %437 = vmatpush1.msra.mxu0 %v404
    %438 = vmatprep.subr.mxu0 0.0
    %439 = vmatpush1.msra.mxu0 %v405
    %440 = vmatprep.subr.mxu0 0.0
    %441 = vmatpush1.msra.mxu0 %v406
    %442 = vmatprep.subr.mxu0 0.0
    %443 = vmatpush1.msra.mxu0 %v407
    %444 = vmatprep.subr.mxu0 0.0
    %445 = vmatpush1.msra.mxu0 %v408
    %446 = vmatprep.subr.mxu0 0.0
    %447 = vmatpush1.msra.mxu0 %v409
    %448 = vmatprep.subr.mxu0 0.0
    %449 = vmatpush1.msra.mxu0 %v410
    %450 = vmatprep.subr.mxu0 0.0
    %451 = vmatpush1.msra.mxu0 %v411
    %452 = vmatprep.subr.mxu0 0.0
    %453 = vmatpush1.msra.mxu0 0.0
    %454 = vmatprep.subr.mxu0 0.0
    %455 = vmatpush1.msra.mxu0 0.0
    %456 = vmatprep.subr.mxu0 0.0
    %457 = vmatpush1.msra.mxu0 0.0
    %458 = vmatprep.subr.mxu0 0.0
    %459 = vmatpush1.msra.mxu0 0.0
    %460 = vmatprep.subr.mxu0 0.0
    %461 = vmatpush1.msra.mxu0 0.0
    %462 = vmatprep.subr.mxu0 0.0
    %463 = vmatpush1.msra.mxu0 0.0
    %464 = vmatprep.subr.mxu0 0.0
    %465 = vmatpush1.msra.mxu0 0.0
    %466 = vmatprep.subr.mxu0 0.0
    %467 = vmatpush1.msra.mxu0 0.0
    %468 = vmatprep.subr.mxu0 0.0
    %469 = vmatpush1.msra.mxu0 0.0
    %470 = vmatprep.subr.mxu0 0.0
    %471 = vmatpush1.msra.mxu0 0.0
    %472 = vmatprep.subr.mxu0 0.0
    %473 = vmatpush1.msra.mxu0 0.0
    %474 = vmatprep.subr.mxu0 0.0
    %475 = vmatpush1.msra.mxu0 0.0
    %476 = vmatprep.subr.mxu0 0.0
    %477 = vmatpush1.msra.mxu0 0.0
    %478 = vmatprep.subr.mxu0 0.0
    %479 = vmatpush1.msra.mxu0 0.0
    %480 = vmatprep.subr.mxu0 0.0
    %481 = vmatpush1.msra.mxu0 0.0
    %482 = vmatprep.subr.mxu0 0.0
    %483 = vmatpush1.msra.mxu0 0.0
    %484 = vmatprep.mubr.f32.mxu0 0.0
    %485 = vmatmul.mubr.f32.gmra.mrb[0].mxu0 %v283
    %v486 = vpop.f32.mrb[0].mxu0
    %v487 = vadd.f32 %v418, %v486
    %v488 = vpop.f32.mrb[0].mxu0
    %489 = vdwg.mxu0
    %490 = vmax.xlane.f32.xlu0 %v487
    %v491 = vpop.xlane.xlu0 %490
    %v492 = vsub.f32 %v487, %v491
    %v493 = vmul.f32 %v492, 1.442695
    %v494 = vpow.pop %v493
    %495 = vadd.xlane.f32.xlu0 %v494
    %v496 = vpop.xlane.xlu0 %495
    %v497 = vld [vmem:[#allocation11] sm:$0xff]
    %v498 = vrcp.pop %v496
    %v499 = vmul.f32 %v497, %v498
    %501 = vset.pattern.permute.xlu0 1
    %502 = vperm.xlu0 %501, %v499
    %v503 = vpop.permute.xlu0 %502
    %v505 = vmul.f32 %v494, %v503
    %s506 = scalar_lea.vmem [#allocation13], 8
    %507 = vst [vmem:[%s506] sm:$0xff] %v505
    %s508 = scalar_lea.vmem [#allocation8], 256
    %v509 = vld [vmem:[%s508] sm:$0xff]
    %v510 = vld [vmem:[%s508 + $0x8] sm:$0xff]
    %v511 = vld [vmem:[%s508 + $0x10] sm:$0xff]
    %v512 = vld [vmem:[%s508 + $0x18] sm:$0xff]
    %v513 = vld [vmem:[%s508 + $0x20] sm:$0xff]
    %v514 = vld [vmem:[%s508 + $0x28] sm:$0xff]
    %v515 = vld [vmem:[%s508 + $0x30] sm:$0xff]
    %v516 = vld [vmem:[%s508 + $0x38] sm:$0xff]
    %v517 = vld [vmem:[%s508 + $0x40] sm:$0xff]
    %v518 = vld [vmem:[%s508 + $0x48] sm:$0xff]
    %v519 = vld [vmem:[%s508 + $0x50] sm:$0xff]
    %v520 = vld [vmem:[%s508 + $0x58] sm:$0xff]
    %v521 = vld [vmem:[%s508 + $0x60] sm:$0xff]
    %v522 = vld [vmem:[%s508 + $0x68] sm:$0xff]
    %v523 = vld [vmem:[%s508 + $0x70] sm:$0xff]
    %v524 = vld [vmem:[%s508 + $0x78] sm:$0xff]
    %s525 = scalar_lea.vmem [#allocation10], 2
    %v526 = vld [vmem:[%s525] sm:$0x1]
    %v528 = vlaneseq
    %v529 = vshrl.u32 %v528, 7
    %v530 = vsub.s32 0, %v529
    %v531 = vrot.slane %v526, %v530
    %533 = vmatprep.subr.mxu0 0.0
    %534 = vmatpush1.msra.mxu0 %v509
    %535 = vmatprep.subr.mxu0 0.0
    %536 = vmatpush1.msra.mxu0 %v510
    %537 = vmatprep.subr.mxu0 0.0
    %538 = vmatpush1.msra.mxu0 %v511
    %539 = vmatprep.subr.mxu0 0.0
    %540 = vmatpush1.msra.mxu0 %v512
    %541 = vmatprep.subr.mxu0 0.0
    %542 = vmatpush1.msra.mxu0 %v513
    %543 = vmatprep.subr.mxu0 0.0
    %544 = vmatpush1.msra.mxu0 %v514
    %545 = vmatprep.subr.mxu0 0.0
    %546 = vmatpush1.msra.mxu0 %v515
    %547 = vmatprep.subr.mxu0 0.0
    %548 = vmatpush1.msra.mxu0 %v516
    %549 = vmatprep.subr.mxu0 0.0
    %550 = vmatpush1.msra.mxu0 %v517
    %551 = vmatprep.subr.mxu0 0.0
    %552 = vmatpush1.msra.mxu0 %v518
    %553 = vmatprep.subr.mxu0 0.0
    %554 = vmatpush1.msra.mxu0 %v519
    %555 = vmatprep.subr.mxu0 0.0
    %556 = vmatpush1.msra.mxu0 %v520
    %557 = vmatprep.subr.mxu0 0.0
    %558 = vmatpush1.msra.mxu0 %v521
    %559 = vmatprep.subr.mxu0 0.0
    %560 = vmatpush1.msra.mxu0 %v522
    %561 = vmatprep.subr.mxu0 0.0
    %562 = vmatpush1.msra.mxu0 %v523
    %563 = vmatprep.subr.mxu0 0.0
    %564 = vmatpush1.msra.mxu0 %v524
    %565 = vmatprep.subr.mxu0 0.0
    %566 = vmatpush1.msra.mxu0 0.0
    %567 = vmatprep.subr.mxu0 0.0
    %568 = vmatpush1.msra.mxu0 0.0
    %569 = vmatprep.subr.mxu0 0.0
    %570 = vmatpush1.msra.mxu0 0.0
    %571 = vmatprep.subr.mxu0 0.0
    %572 = vmatpush1.msra.mxu0 0.0
    %573 = vmatprep.subr.mxu0 0.0
    %574 = vmatpush1.msra.mxu0 0.0
    %575 = vmatprep.subr.mxu0 0.0
    %576 = vmatpush1.msra.mxu0 0.0
    %577 = vmatprep.subr.mxu0 0.0
    %578 = vmatpush1.msra.mxu0 0.0
    %579 = vmatprep.subr.mxu0 0.0
    %580 = vmatpush1.msra.mxu0 0.0
    %581 = vmatprep.subr.mxu0 0.0
    %582 = vmatpush1.msra.mxu0 0.0
    %583 = vmatprep.subr.mxu0 0.0
    %584 = vmatpush1.msra.mxu0 0.0
    %585 = vmatprep.subr.mxu0 0.0
    %586 = vmatpush1.msra.mxu0 0.0
    %587 = vmatprep.subr.mxu0 0.0
    %588 = vmatpush1.msra.mxu0 0.0
    %589 = vmatprep.subr.mxu0 0.0
    %590 = vmatpush1.msra.mxu0 0.0
    %591 = vmatprep.subr.mxu0 0.0
    %592 = vmatpush1.msra.mxu0 0.0
    %593 = vmatprep.subr.mxu0 0.0
    %594 = vmatpush1.msra.mxu0 0.0
    %595 = vmatprep.subr.mxu0 0.0
    %596 = vmatpush1.msra.mxu0 0.0
    %597 = vmatprep.mubr.f32.mxu0 0.0
    %598 = vmatmul.mubr.f32.gmra.mrb[0].mxu0 %v284
    %v599 = vpop.f32.mrb[0].mxu0
    %v600 = vadd.f32 %v531, %v599
    %v601 = vpop.f32.mrb[0].mxu0
    %602 = vdwg.mxu0
    %603 = vmax.xlane.f32.xlu0 %v600
    %v604 = vpop.xlane.xlu0 %603
    %v605 = vsub.f32 %v600, %v604
    %v606 = vmul.f32 %v605, 1.442695
    %v607 = vpow.pop %v606
    %608 = vadd.xlane.f32.xlu0 %v607
    %v609 = vpop.xlane.xlu0 %608
    %v610 = vld [vmem:[#allocation11] sm:$0xff]
    %v611 = vrcp.pop %v609
    %v612 = vmul.f32 %v610, %v611
    %614 = vset.pattern.permute.xlu0 2
    %615 = vperm.xlu0 %614, %v612
    %v616 = vpop.permute.xlu0 %615
    %v618 = vmul.f32 %v607, %v616
    %s619 = scalar_lea.vmem [#allocation13], 16
    %620 = vst [vmem:[%s619] sm:$0xff] %v618
    // Predicated region
    $region50: #{tpu_custom_call.1} parent=1 // pred_check
      _
    $region51: #{tpu_custom_call.1} parent=1 // pred_check_branch
      %622 = sbr.rel (0) target = $region53
    $region52: #{tpu_custom_call.1} parent=1 // pred_region
      %s624 = ssub.s32 384, 384
      %625 = vsyncadd [#allocation4], %s624
      %s626 = sshll.u32 [#allocation13], 4
      %s627 = int_to_ptr.vmem [resolvable:$true] %s626
      %632 = dma.vmem_to_hbm [thread:$0]  %s627, 384, %s6, [#allocation4], 128, 128, 8
    $region53: #{tpu_custom_call.1} parent=1 // pred_fallthru
      _
    // Predicated region
    $region54: #{tpu_custom_call.1} parent=1 // pred_check
      _
    $region55: #{tpu_custom_call.1} parent=1 // pred_check_branch
      %634 = sbr.rel (0) target = $region57
    $region56: #{tpu_custom_call.1} parent=1 // pred_region
      %635 = dma.done [#allocation4], 384
    $region57: #{tpu_custom_call.1} parent=1 // pred_fallthru
      _
    %636 = vsyncpa [#allocation3], 1
    %637 = vsyncpa [#allocation6], 1
    %638 = vsyncpa [#allocation9], 1
    %639 = vsyncpa [#allocation12], 1
    %640 = vsyncpa [#allocation4], 1

// kernel: tpu_custom_call.1
$region0: #{tpu_custom_call.1}
  #allocation0 [shape = 'u32[]', space=smem, size = 0x4, offset = 0x4, fixed_abs, tag = 'smem constant byte address 0x4 - core index']
  #allocation1 [shape = 'u32[144,128]{1,0:T(1,128)}', space=vmem, size = 0x12000, scoped, tag = 'internal scratch']
  %s0 = inlined_call_operand.hbm [shape: f32[8,20], index: 0, kind: input, shape index: {}]
  %s1 = inlined_call_operand.hbm [shape: f32[20,384], index: 1, kind: input, shape index: {}]
  %s2 = inlined_call_operand.hbm [shape: f32[1,384], index: 2, kind: input, shape index: {}]
  %s3 = inlined_call_operand.hbm [shape: f32[3,128,128], index: 3, kind: input, shape index: {}]
  %s4 = inlined_call_operand.hbm [shape: f32[3,1,128], index: 4, kind: input, shape index: {}]
  %s5 = inlined_call_operand.hbm [shape: f32[8,3], index: 5, kind: input, shape index: {}]
  %s6 = inlined_call_operand.hbm [shape: f32[3,8,128], index: 6, kind: output, shape index: {}]
  %s7 = sld [smem:[#allocation0]]
  $region58: #{tpu_custom_call.1} parent=0
    _
  %s9 = ssub.s32 1, %s7
  %s10 = scalar_select 0, %s9, %s7
  $region1: #{tpu_custom_call.1} parent=0
    #allocation2 [shape = 'u8[4096]{0}', space=vmem, size = 0x1000, scoped, tag = 'input window, operand 0, single buffered']
    #allocation3 [shape = 's32[1]{0}', space=sflag, size = 0x4, scoped, tag = 'scoped memory for tpu_custom_call.1']
    #allocation4 [shape = 's32[1]{0}', space=sflag, size = 0x4, scoped, tag = 'scoped memory for tpu_custom_call.1']
    #allocation5 [shape = 'u8[36864]{0}', space=vmem, size = 0x9000, scoped, tag = 'input window, operand 1, single buffered']
    #allocation6 [shape = 's32[1]{0}', space=sflag, size = 0x4, scoped, tag = 'scoped memory for tpu_custom_call.1']
    #allocation7 [shape = 'u8[1536]{0}', space=vmem, size = 0x800, scoped, tag = 'input window, operand 2, single buffered']
    #allocation8 [shape = 'u8[196608]{0}', space=vmem, size = 0x30000, scoped, tag = 'input window, operand 3, single buffered']
    #allocation9 [shape = 's32[1]{0}', space=sflag, size = 0x4, scoped, tag = 'scoped memory for tpu_custom_call.1']
    #allocation10 [shape = 'u8[1536]{0}', space=vmem, size = 0x800, scoped, tag = 'input window, operand 4, single buffered']
    #allocation11 [shape = 'u8[4096]{0}', space=vmem, size = 0x1000, scoped, tag = 'input window, operand 5, single buffered']
    #allocation12 [shape = 's32[1]{0}', space=sflag, size = 0x4, scoped, tag = 'scoped memory for tpu_custom_call.1']
    #allocation13 [shape = 'u8[12288]{0}', space=vmem, size = 0x3000, scoped, tag = 'output window, operand 0, single buffered']
    %11 = vsyncpa [#allocation3], 0
    %12 = vsyncpa [#allocation6], 0
    %13 = vsyncpa [#allocation9], 0
    %14 = vsyncpa [#allocation12], 0
    %15 = vsyncpa [#allocation4], 0
    // Predicated region
    $region2: #{tpu_custom_call.1} parent=1 // pred_check
      _
    $region3: #{tpu_custom_call.1} parent=1 // pred_check_branch
      %17 = sbr.rel (0) target = $region5
    $region4: #{tpu_custom_call.1} parent=1 // pred_region
      %s19 = ssub.s32 128, 128
      %20 = vsyncadd [#allocation3], %s19
      %s22 = sshll.u32 [#allocation2], 4
      %s23 = int_to_ptr.vmem [resolvable:$true] %s22
      %25 = dma.hbm_to_vmem [thread:$0]  %s0, 128, %s23, [#allocation3]
    $region5: #{tpu_custom_call.1} parent=1 // pred_fallthru
      _
    // Predicated region
    $region6: #{tpu_custom_call.1} parent=1 // pred_check
      _
    $region7: #{tpu_custom_call.1} parent=1 // pred_check_branch
      %27 = sbr.rel (0) target = $region9
    $region8: #{tpu_custom_call.1} parent=1 // pred_region
      %s29 = ssub.s32 1152, 1152
      %30 = vsyncadd [#allocation6], %s29
      %s31 = sshll.u32 [#allocation5], 4
      %s32 = int_to_ptr.vmem [resolvable:$true] %s31
      %37 = dma.hbm_to_vmem [thread:$0]  %s1, 1152, %s32, [#allocation6], 384, 384, 24
    $region9: #{tpu_custom_call.1} parent=1 // pred_fallthru
      _
    // Predicated region
    $region10: #{tpu_custom_call.1} parent=1 // pred_check
      _
    $region11: #{tpu_custom_call.1} parent=1 // pred_check_branch
      %39 = sbr.rel (0) target = $region13
    $region12: #{tpu_custom_call.1} parent=1 // pred_region
      %s41 = ssub.s32 48, 48
      %42 = vsyncadd [#allocation6], %s41
      %s44 = sshll.u32 [#allocation7], 4
      %s45 = int_to_ptr.vmem [resolvable:$true] %s44
      %47 = dma.hbm_to_vmem [thread:$0]  %s2, 48, %s45, [#allocation6]
    $region13: #{tpu_custom_call.1} parent=1 // pred_fallthru
      _
    // Predicated region
    $region14: #{tpu_custom_call.1} parent=1 // pred_check
      _
    $region15: #{tpu_custom_call.1} parent=1 // pred_check_branch
      %49 = sbr.rel (0) target = $region17
    $region16: #{tpu_custom_call.1} parent=1 // pred_region
      %s51 = ssub.s32 6144, 6144
      %52 = vsyncadd [#allocation9], %s51
      %s53 = sshll.u32 [#allocation8], 4
      %s54 = int_to_ptr.vmem [resolvable:$true] %s53
      %59 = dma.hbm_to_vmem [thread:$0]  %s3, 6144, %s54, [#allocation9], 128, 128, 8
    $region17: #{tpu_custom_call.1} parent=1 // pred_fallthru
      _
    // Predicated region
    $region18: #{tpu_custom_call.1} parent=1 // pred_check
      _
    $region19: #{tpu_custom_call.1} parent=1 // pred_check_branch
      %61 = sbr.rel (0) target = $region21
    $region20: #{tpu_custom_call.1} parent=1 // pred_region
      %s63 = ssub.s32 48, 48
      %64 = vsyncadd [#allocation9], %s63
      %s65 = sshll.u32 [#allocation10], 4
      %s66 = int_to_ptr.vmem [resolvable:$true] %s65
      %71 = dma.hbm_to_vmem [thread:$0]  %s4, 48, %s66, [#allocation9], 16, 16, 1
    $region21: #{tpu_custom_call.1} parent=1 // pred_fallthru
      _
    // Predicated region
    $region22: #{tpu_custom_call.1} parent=1 // pred_check
      _
    $region23: #{tpu_custom_call.1} parent=1 // pred_check_branch
      %73 = sbr.rel (0) target = $region25
    $region24: #{tpu_custom_call.1} parent=1 // pred_region
      %s75 = ssub.s32 128, 128
      %76 = vsyncadd [#allocation12], %s75
      %s78 = sshll.u32 [#allocation11], 4
      %s79 = int_to_ptr.vmem [resolvable:$true] %s78
      %81 = dma.hbm_to_vmem [thread:$0]  %s5, 128, %s79, [#allocation12]
    $region25: #{tpu_custom_call.1} parent=1 // pred_fallthru
      _
    // Predicated region
    $region26: #{tpu_custom_call.1} parent=1 // pred_check
      _
    $region27: #{tpu_custom_call.1} parent=1 // pred_check_branch
      %83 = sbr.rel (0) target = $region29
    $region28: #{tpu_custom_call.1} parent=1 // pred_region
      %84 = dma.done [#allocation3], 128
    $region29: #{tpu_custom_call.1} parent=1 // pred_fallthru
      _
    // Predicated region
    $region30: #{tpu_custom_call.1} parent=1 // pred_check
      _
    $region31: #{tpu_custom_call.1} parent=1 // pred_check_branch
      %86 = sbr.rel (0) target = $region33
    $region32: #{tpu_custom_call.1} parent=1 // pred_region
      %87 = dma.done [#allocation6], 1152
    $region33: #{tpu_custom_call.1} parent=1 // pred_fallthru
      _
    // Predicated region
    $region34: #{tpu_custom_call.1} parent=1 // pred_check
      _
    $region35: #{tpu_custom_call.1} parent=1 // pred_check_branch
      %89 = sbr.rel (0) target = $region37
    $region36: #{tpu_custom_call.1} parent=1 // pred_region
      %90 = dma.done [#allocation6], 48
    $region37: #{tpu_custom_call.1} parent=1 // pred_fallthru
      _
    // Predicated region
    $region38: #{tpu_custom_call.1} parent=1 // pred_check
      _
    $region39: #{tpu_custom_call.1} parent=1 // pred_check_branch
      %92 = sbr.rel (0) target = $region41
    $region40: #{tpu_custom_call.1} parent=1 // pred_region
      %93 = dma.done [#allocation9], 6144
    $region41: #{tpu_custom_call.1} parent=1 // pred_fallthru
      _
    // Predicated region
    $region42: #{tpu_custom_call.1} parent=1 // pred_check
      _
    $region43: #{tpu_custom_call.1} parent=1 // pred_check_branch
      %95 = sbr.rel (0) target = $region45
    $region44: #{tpu_custom_call.1} parent=1 // pred_region
      %96 = dma.done [#allocation9], 48
    $region45: #{tpu_custom_call.1} parent=1 // pred_fallthru
      _
    // Predicated region
    $region46: #{tpu_custom_call.1} parent=1 // pred_check
      _
    $region47: #{tpu_custom_call.1} parent=1 // pred_check_branch
      %98 = sbr.rel (0) target = $region49
    $region48: #{tpu_custom_call.1} parent=1 // pred_region
      %99 = dma.done [#allocation12], 128
    $region49: #{tpu_custom_call.1} parent=1 // pred_fallthru
      _
    %v100 = vld [vmem:[#allocation2] sm:$0xff]
    %v101 = vld [vmem:[#allocation5] sm:$0xff]
    %v102 = vld [vmem:[#allocation5 + $0x8] sm:$0xff]
    %v103 = vld [vmem:[#allocation5 + $0x10] sm:$0xff]
    %v104 = vld [vmem:[#allocation5 + $0x18] sm:$0xff]
    %v105 = vld [vmem:[#allocation5 + $0x20] sm:$0xff]
    %v106 = vld [vmem:[#allocation5 + $0x28] sm:$0xff]
    %v107 = vld [vmem:[#allocation5 + $0x30] sm:$0xf]
    %v108 = vld [vmem:[#allocation5 + $0x38] sm:$0xf]
    %v109 = vld [vmem:[#allocation5 + $0x40] sm:$0xf]
    %v110 = vld [vmem:[#allocation7] sm:$0x7]
    %v112 = vlaneseq
    %v113 = vshrl.u32 %v112, 7
    %v114 = vsub.s32 0, %v113
    %v115 = vrot.slane %v110, %v114
    %v116 = vlaneseq
    %v117 = vshrl.u32 %v116, 7
    %v118 = vsub.s32 1, %v117
    %v119 = vrot.slane %v110, %v118
    %v120 = vlaneseq
    %v121 = vshrl.u32 %v120, 7
    %v122 = vsub.s32 2, %v121
    %v123 = vrot.slane %v110, %v122
    %vm127 = vcmask 162816
    %v129 = vsel %vm127, %v100, 0
    %vm131 = vcmask 1043456
    %v133 = vsel %vm131, %v107, 0
    %v136 = vsel %vm131, %v108, 0
    %v139 = vsel %vm131, %v109, 0
    %141 = vmatprep.subr.mxu0 %v102
    %142 = vmatpush1.msra.mxu0 %v101
    %143 = vmatprep.subr.mxu0 %v105
    %144 = vmatpush1.msra.mxu0 %v104
    %145 = vmatprep.subr.mxu0 %v136
    %146 = vmatpush1.msra.mxu0 %v133
    %147 = vmatprep.subr.mxu0 0.0
    %148 = vmatpush1.msra.mxu0 0.0
    %149 = vmatprep.subr.mxu0 0.0
    %150 = vmatpush1.msra.mxu0 0.0
    %151 = vmatprep.subr.mxu0 0.0
    %152 = vmatpush1.msra.mxu0 0.0
    %153 = vmatprep.subr.mxu0 0.0
    %154 = vmatpush1.msra.mxu0 0.0
    %155 = vmatprep.subr.mxu0 0.0
    %156 = vmatpush1.msra.mxu0 0.0
    %157 = vmatprep.subr.mxu0 0.0
    %158 = vmatpush1.msra.mxu0 0.0
    %159 = vmatprep.subr.mxu0 0.0
    %160 = vmatpush1.msra.mxu0 0.0
    %161 = vmatprep.subr.mxu0 0.0
    %162 = vmatpush1.msra.mxu0 0.0
    %163 = vmatprep.subr.mxu0 0.0
    %164 = vmatpush1.msra.mxu0 0.0
    %165 = vmatprep.subr.mxu0 0.0
    %166 = vmatpush1.msra.mxu0 0.0
    %167 = vmatprep.subr.mxu0 0.0
    %168 = vmatpush1.msra.mxu0 0.0
    %169 = vmatprep.subr.mxu0 0.0
    %170 = vmatpush1.msra.mxu0 0.0
    %171 = vmatprep.subr.mxu0 0.0
    %172 = vmatpush1.msra.mxu0 0.0
    %173 = vmatprep.subr.mxu0 0.0
    %174 = vmatpush1.msra.mxu0 0.0
    %175 = vmatprep.subr.mxu0 0.0
    %176 = vmatpush1.msra.mxu0 0.0
    %177 = vmatprep.subr.mxu0 0.0
    %178 = vmatpush1.msra.mxu0 0.0
    %179 = vmatprep.subr.mxu0 0.0
    %180 = vmatpush1.msra.mxu0 0.0
    %181 = vmatprep.subr.mxu0 0.0
    %182 = vmatpush1.msra.mxu0 0.0
    %183 = vmatprep.subr.mxu0 0.0
    %184 = vmatpush1.msra.mxu0 0.0
    %185 = vmatprep.subr.mxu0 0.0
    %186 = vmatpush1.msra.mxu0 0.0
    %187 = vmatprep.subr.mxu0 0.0
    %188 = vmatpush1.msra.mxu0 0.0
    %189 = vmatprep.subr.mxu0 0.0
    %190 = vmatpush1.msra.mxu0 0.0
    %191 = vmatprep.subr.mxu0 0.0
    %192 = vmatpush1.msra.mxu0 0.0
    %193 = vmatprep.subr.mxu0 0.0
    %194 = vmatpush1.msra.mxu0 0.0
    %195 = vmatprep.subr.mxu0 0.0
    %196 = vmatpush1.msra.mxu0 0.0
    %197 = vmatprep.subr.mxu0 0.0
    %198 = vmatpush1.msra.mxu0 0.0
    %199 = vmatprep.subr.mxu0 0.0
    %200 = vmatpush1.msra.mxu0 0.0
    %201 = vmatprep.subr.mxu0 0.0
    %202 = vmatpush1.msra.mxu0 0.0
    %203 = vmatprep.subr.mxu0 0.0
    %204 = vmatpush1.msra.mxu0 0.0
    %205 = vmatprep.mubr.f32.mxu0 0.0
    %206 = vmatmul.mubr.f32.gmra.mrb[0].mxu0 %v129
    %v207 = vpop.f32.mrb[0].mxu0
    %v208 = vadd.f32 %v115, %v207
    %v209 = vpop.f32.mrb[0].mxu0
    %v210 = vadd.f32 %v119, %v209
    %211 = vdwg.mxu0
    %212 = vmatprep.subr.mxu0 0.0
    %213 = vmatpush1.msra.mxu0 %v103
    %214 = vmatprep.subr.mxu0 0.0
    %215 = vmatpush1.msra.mxu0 %v106
    %216 = vmatprep.subr.mxu0 0.0
    %217 = vmatpush1.msra.mxu0 %v139
    %218 = vmatprep.subr.mxu0 0.0
    %219 = vmatpush1.msra.mxu0 0.0
    %220 = vmatprep.subr.mxu0 0.0
    %221 = vmatpush1.msra.mxu0 0.0
    %222 = vmatprep.subr.mxu0 0.0
    %223 = vmatpush1.msra.mxu0 0.0
    %224 = vmatprep.subr.mxu0 0.0
    %225 = vmatpush1.msra.mxu0 0.0
    %226 = vmatprep.subr.mxu0 0.0
    %227 = vmatpush1.msra.mxu0 0.0
    %228 = vmatprep.subr.mxu0 0.0
    %229 = vmatpush1.msra.mxu0 0.0
    %230 = vmatprep.subr.mxu0 0.0
    %231 = vmatpush1.msra.mxu0 0.0
    %232 = vmatprep.subr.mxu0 0.0
    %233 = vmatpush1.msra.mxu0 0.0
    %234 = vmatprep.subr.mxu0 0.0
    %235 = vmatpush1.msra.mxu0 0.0
    %236 = vmatprep.subr.mxu0 0.0
    %237 = vmatpush1.msra.mxu0 0.0
    %238 = vmatprep.subr.mxu0 0.0
    %239 = vmatpush1.msra.mxu0 0.0
    %240 = vmatprep.subr.mxu0 0.0
    %241 = vmatpush1.msra.mxu0 0.0
    %242 = vmatprep.subr.mxu0 0.0
    %243 = vmatpush1.msra.mxu0 0.0
    %244 = vmatprep.subr.mxu0 0.0
    %245 = vmatpush1.msra.mxu0 0.0
    %246 = vmatprep.subr.mxu0 0.0
    %247 = vmatpush1.msra.mxu0 0.0
    %248 = vmatprep.subr.mxu0 0.0
    %249 = vmatpush1.msra.mxu0 0.0
    %250 = vmatprep.subr.mxu0 0.0
    %251 = vmatpush1.msra.mxu0 0.0
    %252 = vmatprep.subr.mxu0 0.0
    %253 = vmatpush1.msra.mxu0 0.0
    %254 = vmatprep.subr.mxu0 0.0
    %255 = vmatpush1.msra.mxu0 0.0
    %256 = vmatprep.subr.mxu0 0.0
    %257 = vmatpush1.msra.mxu0 0.0
    %258 = vmatprep.subr.mxu0 0.0
    %259 = vmatpush1.msra.mxu0 0.0
    %260 = vmatprep.subr.mxu0 0.0
    %261 = vmatpush1.msra.mxu0 0.0
    %262 = vmatprep.subr.mxu0 0.0
    %263 = vmatpush1.msra.mxu0 0.0
    %264 = vmatprep.subr.mxu0 0.0
    %265 = vmatpush1.msra.mxu0 0.0
    %266 = vmatprep.subr.mxu0 0.0
    %267 = vmatpush1.msra.mxu0 0.0
    %268 = vmatprep.subr.mxu0 0.0
    %269 = vmatpush1.msra.mxu0 0.0
    %270 = vmatprep.subr.mxu0 0.0
    %271 = vmatpush1.msra.mxu0 0.0
    %272 = vmatprep.subr.mxu0 0.0
    %273 = vmatpush1.msra.mxu0 0.0
    %274 = vmatprep.subr.mxu0 0.0
    %275 = vmatpush1.msra.mxu0 0.0
    %276 = vmatprep.mubr.f32.mxu0 0.0
    %277 = vmatmul.mubr.f32.gmra.mrb[0].mxu0 %v129
    %v278 = vpop.f32.mrb[0].mxu0
    %v279 = vadd.f32 %v123, %v278
    %v280 = vpop.f32.mrb[0].mxu0
    %281 = vdwg.mxu0
    %v282 = vmax.f32 %v208, 0.0
    %v283 = vmax.f32 %v210, 0.0
    %v284 = vmax.f32 %v279, 0.0
    %v285 = vld [vmem:[#allocation8] sm:$0xff]
    %v286 = vld [vmem:[#allocation8 + $0x8] sm:$0xff]
    %v287 = vld [vmem:[#allocation8 + $0x10] sm:$0xff]
    %v288 = vld [vmem:[#allocation8 + $0x18] sm:$0xff]
    %v289 = vld [vmem:[#allocation8 + $0x20] sm:$0xff]
    %v290 = vld [vmem:[#allocation8 + $0x28] sm:$0xff]
    %v291 = vld [vmem:[#allocation8 + $0x30] sm:$0xff]
    %v292 = vld [vmem:[#allocation8 + $0x38] sm:$0xff]
    %v293 = vld [vmem:[#allocation8 + $0x40] sm:$0xff]
    %v294 = vld [vmem:[#allocation8 + $0x48] sm:$0xff]
    %v295 = vld [vmem:[#allocation8 + $0x50] sm:$0xff]
    %v296 = vld [vmem:[#allocation8 + $0x58] sm:$0xff]
    %v297 = vld [vmem:[#allocation8 + $0x60] sm:$0xff]
    %v298 = vld [vmem:[#allocation8 + $0x68] sm:$0xff]
    %v299 = vld [vmem:[#allocation8 + $0x70] sm:$0xff]
    %v300 = vld [vmem:[#allocation8 + $0x78] sm:$0xff]
    %v301 = vld [vmem:[#allocation10] sm:$0x1]
    %v303 = vlaneseq
    %v304 = vshrl.u32 %v303, 7
    %v305 = vsub.s32 0, %v304
    %v306 = vrot.slane %v301, %v305
    %308 = vmatprep.subr.mxu0 0.0
    %309 = vmatpush1.msra.mxu0 %v285
    %310 = vmatprep.subr.mxu0 0.0
    %311 = vmatpush1.msra.mxu0 %v286
    %312 = vmatprep.subr.mxu0 0.0
    %313 = vmatpush1.msra.mxu0 %v287
    %314 = vmatprep.subr.mxu0 0.0
    %315 = vmatpush1.msra.mxu0 %v288
    %316 = vmatprep.subr.mxu0 0.0
    %317 = vmatpush1.msra.mxu0 %v289
    %318 = vmatprep.subr.mxu0 0.0
    %319 = vmatpush1.msra.mxu0 %v290
    %320 = vmatprep.subr.mxu0 0.0
    %321 = vmatpush1.msra.mxu0 %v291
    %322 = vmatprep.subr.mxu0 0.0
    %323 = vmatpush1.msra.mxu0 %v292
    %324 = vmatprep.subr.mxu0 0.0
    %325 = vmatpush1.msra.mxu0 %v293
    %326 = vmatprep.subr.mxu0 0.0
    %327 = vmatpush1.msra.mxu0 %v294
    %328 = vmatprep.subr.mxu0 0.0
    %329 = vmatpush1.msra.mxu0 %v295
    %330 = vmatprep.subr.mxu0 0.0
    %331 = vmatpush1.msra.mxu0 %v296
    %332 = vmatprep.subr.mxu0 0.0
    %333 = vmatpush1.msra.mxu0 %v297
    %334 = vmatprep.subr.mxu0 0.0
    %335 = vmatpush1.msra.mxu0 %v298
    %336 = vmatprep.subr.mxu0 0.0
    %337 = vmatpush1.msra.mxu0 %v299
    %338 = vmatprep.subr.mxu0 0.0
    %339 = vmatpush1.msra.mxu0 %v300
    %340 = vmatprep.subr.mxu0 0.0
    %341 = vmatpush1.msra.mxu0 0.0
    %342 = vmatprep.subr.mxu0 0.0
    %343 = vmatpush1.msra.mxu0 0.0
    %344 = vmatprep.subr.mxu0 0.0
    %345 = vmatpush1.msra.mxu0 0.0
    %346 = vmatprep.subr.mxu0 0.0
    %347 = vmatpush1.msra.mxu0 0.0
    %348 = vmatprep.subr.mxu0 0.0
    %349 = vmatpush1.msra.mxu0 0.0
    %350 = vmatprep.subr.mxu0 0.0
    %351 = vmatpush1.msra.mxu0 0.0
    %352 = vmatprep.subr.mxu0 0.0
    %353 = vmatpush1.msra.mxu0 0.0
    %354 = vmatprep.subr.mxu0 0.0
    %355 = vmatpush1.msra.mxu0 0.0
    %356 = vmatprep.subr.mxu0 0.0
    %357 = vmatpush1.msra.mxu0 0.0
    %358 = vmatprep.subr.mxu0 0.0
    %359 = vmatpush1.msra.mxu0 0.0
    %360 = vmatprep.subr.mxu0 0.0
    %361 = vmatpush1.msra.mxu0 0.0
    %362 = vmatprep.subr.mxu0 0.0
    %363 = vmatpush1.msra.mxu0 0.0
    %364 = vmatprep.subr.mxu0 0.0
    %365 = vmatpush1.msra.mxu0 0.0
    %366 = vmatprep.subr.mxu0 0.0
    %367 = vmatpush1.msra.mxu0 0.0
    %368 = vmatprep.subr.mxu0 0.0
    %369 = vmatpush1.msra.mxu0 0.0
    %370 = vmatprep.subr.mxu0 0.0
    %371 = vmatpush1.msra.mxu0 0.0
    %372 = vmatprep.mubr.f32.mxu0 0.0
    %373 = vmatmul.mubr.f32.gmra.mrb[0].mxu0 %v282
    %v374 = vpop.f32.mrb[0].mxu0
    %v375 = vadd.f32 %v306, %v374
    %v376 = vpop.f32.mrb[0].mxu0
    %377 = vdwg.mxu0
    %378 = vmax.xlane.f32.xlu0 %v375
    %v379 = vpop.xlane.xlu0 %378
    %v380 = vsub.f32 %v375, %v379
    %v381 = vmul.f32 %v380, 1.442695
    %v382 = vpow.pop %v381
    %383 = vadd.xlane.f32.xlu0 %v382
    %v384 = vpop.xlane.xlu0 %383
    %v385 = vld [vmem:[#allocation11] sm:$0xff]
    %v386 = vrcp.pop %v384
    %v387 = vmul.f32 %v385, %v386
    %389 = vset.pattern.permute.xlu0 0
    %390 = vperm.xlu0 %389, %v387
    %v391 = vpop.permute.xlu0 %390
    %v393 = vmul.f32 %v382, %v391
    %394 = vst [vmem:[#allocation13] sm:$0xff] %v393
    %s395 = scalar_lea.vmem [#allocation8], 128
    %v396 = vld [vmem:[%s395] sm:$0xff]
    %v397 = vld [vmem:[%s395 + $0x8] sm:$0xff]
    %v398 = vld [vmem:[%s395 + $0x10] sm:$0xff]
    %v399 = vld [vmem:[%s395 + $0x18] sm:$0xff]
    %v400 = vld [vmem:[%s395 + $0x20] sm:$0xff]
    %v401 = vld [vmem:[%s395 + $0x28] sm:$0xff]
    %v402 = vld [vmem:[%s395 + $0x30] sm:$0xff]
    %v403 = vld [vmem:[%s395 + $0x38] sm:$0xff]
    %v404 = vld [vmem:[%s395 + $0x40] sm:$0xff]
    %v405 = vld [vmem:[%s395 + $0x48] sm:$0xff]
    %v406 = vld [vmem:[%s395 + $0x50] sm:$0xff]
    %v407 = vld [vmem:[%s395 + $0x58] sm:$0xff]
    %v408 = vld [vmem:[%s395 + $0x60] sm:$0xff]
    %v409 = vld [vmem:[%s395 + $0x68] sm:$0xff]
    %v410 = vld [vmem:[%s395 + $0x70] sm:$0xff]
    %v411 = vld [vmem:[%s395 + $0x78] sm:$0xff]
    %s412 = scalar_lea.vmem [#allocation10], 1
    %v413 = vld [vmem:[%s412] sm:$0x1]
    %v415 = vlaneseq
    %v416 = vshrl.u32 %v415, 7
    %v417 = vsub.s32 0, %v416
    %v418 = vrot.slane %v413, %v417
    %420 = vmatprep.subr.mxu0 0.0
    %421 = vmatpush1.msra.mxu0 %v396
    %422 = vmatprep.subr.mxu0 0.0
    %423 = vmatpush1.msra.mxu0 %v397
    %424 = vmatprep.subr.mxu0 0.0
    %425 = vmatpush1.msra.mxu0 %v398
    %426 = vmatprep.subr.mxu0 0.0
    %427 = vmatpush1.msra.mxu0 %v399
    %428 = vmatprep.subr.mxu0 0.0
    %429 = vmatpush1.msra.mxu0 %v400
    %430 = vmatprep.subr.mxu0 0.0
    %431 = vmatpush1.msra.mxu0 %v401
    %432 = vmatprep.subr.mxu0 0.0
    %433 = vmatpush1.msra.mxu0 %v402
    %434 = vmatprep.subr.mxu0 0.0
    %435 = vmatpush1.msra.mxu0 %v403
    %436 = vmatprep.subr.mxu0 0.0
    %437 = vmatpush1.msra.mxu0 %v404
    %438 = vmatprep.subr.mxu0 0.0
    %439 = vmatpush1.msra.mxu0 %v405
    %440 = vmatprep.subr.mxu0 0.0
    %441 = vmatpush1.msra.mxu0 %v406
    %442 = vmatprep.subr.mxu0 0.0
    %443 = vmatpush1.msra.mxu0 %v407
    %444 = vmatprep.subr.mxu0 0.0
    %445 = vmatpush1.msra.mxu0 %v408
    %446 = vmatprep.subr.mxu0 0.0
    %447 = vmatpush1.msra.mxu0 %v409
    %448 = vmatprep.subr.mxu0 0.0
    %449 = vmatpush1.msra.mxu0 %v410
    %450 = vmatprep.subr.mxu0 0.0
    %451 = vmatpush1.msra.mxu0 %v411
    %452 = vmatprep.subr.mxu0 0.0
    %453 = vmatpush1.msra.mxu0 0.0
    %454 = vmatprep.subr.mxu0 0.0
    %455 = vmatpush1.msra.mxu0 0.0
    %456 = vmatprep.subr.mxu0 0.0
    %457 = vmatpush1.msra.mxu0 0.0
    %458 = vmatprep.subr.mxu0 0.0
    %459 = vmatpush1.msra.mxu0 0.0
    %460 = vmatprep.subr.mxu0 0.0
    %461 = vmatpush1.msra.mxu0 0.0
    %462 = vmatprep.subr.mxu0 0.0
    %463 = vmatpush1.msra.mxu0 0.0
    %464 = vmatprep.subr.mxu0 0.0
    %465 = vmatpush1.msra.mxu0 0.0
    %466 = vmatprep.subr.mxu0 0.0
    %467 = vmatpush1.msra.mxu0 0.0
    %468 = vmatprep.subr.mxu0 0.0
    %469 = vmatpush1.msra.mxu0 0.0
    %470 = vmatprep.subr.mxu0 0.0
    %471 = vmatpush1.msra.mxu0 0.0
    %472 = vmatprep.subr.mxu0 0.0
    %473 = vmatpush1.msra.mxu0 0.0
    %474 = vmatprep.subr.mxu0 0.0
    %475 = vmatpush1.msra.mxu0 0.0
    %476 = vmatprep.subr.mxu0 0.0
    %477 = vmatpush1.msra.mxu0 0.0
    %478 = vmatprep.subr.mxu0 0.0
    %479 = vmatpush1.msra.mxu0 0.0
    %480 = vmatprep.subr.mxu0 0.0
    %481 = vmatpush1.msra.mxu0 0.0
    %482 = vmatprep.subr.mxu0 0.0
    %483 = vmatpush1.msra.mxu0 0.0
    %484 = vmatprep.mubr.f32.mxu0 0.0
    %485 = vmatmul.mubr.f32.gmra.mrb[0].mxu0 %v283
    %v486 = vpop.f32.mrb[0].mxu0
    %v487 = vadd.f32 %v418, %v486
    %v488 = vpop.f32.mrb[0].mxu0
    %489 = vdwg.mxu0
    %490 = vmax.xlane.f32.xlu0 %v487
    %v491 = vpop.xlane.xlu0 %490
    %v492 = vsub.f32 %v487, %v491
    %v493 = vmul.f32 %v492, 1.442695
    %v494 = vpow.pop %v493
    %495 = vadd.xlane.f32.xlu0 %v494
    %v496 = vpop.xlane.xlu0 %495
    %v497 = vld [vmem:[#allocation11] sm:$0xff]
    %v498 = vrcp.pop %v496
    %v499 = vmul.f32 %v497, %v498
    %501 = vset.pattern.permute.xlu0 1
    %502 = vperm.xlu0 %501, %v499
    %v503 = vpop.permute.xlu0 %502
    %v505 = vmul.f32 %v494, %v503
    %s506 = scalar_lea.vmem [#allocation13], 8
    %507 = vst [vmem:[%s506] sm:$0xff] %v505
    %s508 = scalar_lea.vmem [#allocation8], 256
    %v509 = vld [vmem:[%s508] sm:$0xff]
    %v510 = vld [vmem:[%s508 + $0x8] sm:$0xff]
    %v511 = vld [vmem:[%s508 + $0x10] sm:$0xff]
    %v512 = vld [vmem:[%s508 + $0x18] sm:$0xff]
    %v513 = vld [vmem:[%s508 + $0x20] sm:$0xff]
    %v514 = vld [vmem:[%s508 + $0x28] sm:$0xff]
    %v515 = vld [vmem:[%s508 + $0x30] sm:$0xff]
    %v516 = vld [vmem:[%s508 + $0x38] sm:$0xff]
    %v517 = vld [vmem:[%s508 + $0x40] sm:$0xff]
    %v518 = vld [vmem:[%s508 + $0x48] sm:$0xff]
    %v519 = vld [vmem:[%s508 + $0x50] sm:$0xff]
    %v520 = vld [vmem:[%s508 + $0x58] sm:$0xff]
    %v521 = vld [vmem:[%s508 + $0x60] sm:$0xff]
    %v522 = vld [vmem:[%s508 + $0x68] sm:$0xff]
    %v523 = vld [vmem:[%s508 + $0x70] sm:$0xff]
    %v524 = vld [vmem:[%s508 + $0x78] sm:$0xff]
    %s525 = scalar_lea.vmem [#allocation10], 2
    %v526 = vld [vmem:[%s525] sm:$0x1]
    %v528 = vlaneseq
    %v529 = vshrl.u32 %v528, 7
    %v530 = vsub.s32 0, %v529
    %v531 = vrot.slane %v526, %v530
    %533 = vmatprep.subr.mxu0 0.0
    %534 = vmatpush1.msra.mxu0 %v509
    %535 = vmatprep.subr.mxu0 0.0
    %536 = vmatpush1.msra.mxu0 %v510
    %537 = vmatprep.subr.mxu0 0.0
    %538 = vmatpush1.msra.mxu0 %v511
    %539 = vmatprep.subr.mxu0 0.0
    %540 = vmatpush1.msra.mxu0 %v512
    %541 = vmatprep.subr.mxu0 0.0
    %542 = vmatpush1.msra.mxu0 %v513
    %543 = vmatprep.subr.mxu0 0.0
    %544 = vmatpush1.msra.mxu0 %v514
    %545 = vmatprep.subr.mxu0 0.0
    %546 = vmatpush1.msra.mxu0 %v515
    %547 = vmatprep.subr.mxu0 0.0
    %548 = vmatpush1.msra.mxu0 %v516
    %549 = vmatprep.subr.mxu0 0.0
    %550 = vmatpush1.msra.mxu0 %v517
    %551 = vmatprep.subr.mxu0 0.0
    %552 = vmatpush1.msra.mxu0 %v518
    %553 = vmatprep.subr.mxu0 0.0
    %554 = vmatpush1.msra.mxu0 %v519
    %555 = vmatprep.subr.mxu0 0.0
    %556 = vmatpush1.msra.mxu0 %v520
    %557 = vmatprep.subr.mxu0 0.0
    %558 = vmatpush1.msra.mxu0 %v521
    %559 = vmatprep.subr.mxu0 0.0
    %560 = vmatpush1.msra.mxu0 %v522
    %561 = vmatprep.subr.mxu0 0.0
    %562 = vmatpush1.msra.mxu0 %v523
    %563 = vmatprep.subr.mxu0 0.0
    %564 = vmatpush1.msra.mxu0 %v524
    %565 = vmatprep.subr.mxu0 0.0
    %566 = vmatpush1.msra.mxu0 0.0
    %567 = vmatprep.subr.mxu0 0.0
    %568 = vmatpush1.msra.mxu0 0.0
    %569 = vmatprep.subr.mxu0 0.0
    %570 = vmatpush1.msra.mxu0 0.0
    %571 = vmatprep.subr.mxu0 0.0
    %572 = vmatpush1.msra.mxu0 0.0
    %573 = vmatprep.subr.mxu0 0.0
    %574 = vmatpush1.msra.mxu0 0.0
    %575 = vmatprep.subr.mxu0 0.0
    %576 = vmatpush1.msra.mxu0 0.0
    %577 = vmatprep.subr.mxu0 0.0
    %578 = vmatpush1.msra.mxu0 0.0
    %579 = vmatprep.subr.mxu0 0.0
    %580 = vmatpush1.msra.mxu0 0.0
    %581 = vmatprep.subr.mxu0 0.0
    %582 = vmatpush1.msra.mxu0 0.0
    %583 = vmatprep.subr.mxu0 0.0
    %584 = vmatpush1.msra.mxu0 0.0
    %585 = vmatprep.subr.mxu0 0.0
    %586 = vmatpush1.msra.mxu0 0.0
    %587 = vmatprep.subr.mxu0 0.0
    %588 = vmatpush1.msra.mxu0 0.0
    %589 = vmatprep.subr.mxu0 0.0
    %590 = vmatpush1.msra.mxu0 0.0
    %591 = vmatprep.subr.mxu0 0.0
    %592 = vmatpush1.msra.mxu0 0.0
    %593 = vmatprep.subr.mxu0 0.0
    %594 = vmatpush1.msra.mxu0 0.0
    %595 = vmatprep.subr.mxu0 0.0
    %596 = vmatpush1.msra.mxu0 0.0
    %597 = vmatprep.mubr.f32.mxu0 0.0
    %598 = vmatmul.mubr.f32.gmra.mrb[0].mxu0 %v284
    %v599 = vpop.f32.mrb[0].mxu0
    %v600 = vadd.f32 %v531, %v599
    %v601 = vpop.f32.mrb[0].mxu0
    %602 = vdwg.mxu0
    %603 = vmax.xlane.f32.xlu0 %v600
    %v604 = vpop.xlane.xlu0 %603
    %v605 = vsub.f32 %v600, %v604
    %v606 = vmul.f32 %v605, 1.442695
    %v607 = vpow.pop %v606
    %608 = vadd.xlane.f32.xlu0 %v607
    %v609 = vpop.xlane.xlu0 %608
    %v610 = vld [vmem:[#allocation11] sm:$0xff]
    %v611 = vrcp.pop %v609
    %v612 = vmul.f32 %v610, %v611
    %614 = vset.pattern.permute.xlu0 2
    %615 = vperm.xlu0 %614, %v612
    %v616 = vpop.permute.xlu0 %615
    %v618 = vmul.f32 %v607, %v616
    %s619 = scalar_lea.vmem [#allocation13], 16
    %620 = vst [vmem:[%s619] sm:$0xff] %v618
    // Predicated region
    $region50: #{tpu_custom_call.1} parent=1 // pred_check
      _
    $region51: #{tpu_custom_call.1} parent=1 // pred_check_branch
      %622 = sbr.rel (0) target = $region53
    $region52: #{tpu_custom_call.1} parent=1 // pred_region
      %s624 = ssub.s32 384, 384
      %625 = vsyncadd [#allocation4], %s624
      %s626 = sshll.u32 [#allocation13], 4
      %s627 = int_to_ptr.vmem [resolvable:$true] %s626
      %632 = dma.vmem_to_hbm [thread:$0]  %s627, 384, %s6, [#allocation4], 128, 128, 8
    $region53: #{tpu_custom_call.1} parent=1 // pred_fallthru
      _
    // Predicated region
    $region54: #{tpu_custom_call.1} parent=1 // pred_check
      _
    $region55: #{tpu_custom_call.1} parent=1 // pred_check_branch
      %634 = sbr.rel (0) target = $region57
    $region56: #{tpu_custom_call.1} parent=1 // pred_region
      %635 = dma.done [#allocation4], 384
    $region57: #{tpu_custom_call.1} parent=1 // pred_fallthru
      _
    %636 = vsyncpa [#allocation3], 1
    %637 = vsyncpa [#allocation6], 1
    %638 = vsyncpa [#allocation9], 1
    %639 = vsyncpa [#allocation12], 1
    %640 = vsyncpa [#allocation4], 1

</llo_original>
